<compile_context>
chip_gen: v7x
topology: tpu7x:2x2x1
jax: 0.10.0
libtpu: 0.0.40
codegen_flags: <defaults>
</compile_context>

<pallas_src>
import functools
import math

import jax
import jax.numpy as jnp
from jax import lax
from jax.experimental import pallas as pl
from jax.experimental.pallas import tpu as pltpu

_LANES = 128  # TPU vreg lane width


def _round_up(x, m):
    return (x + m - 1) // m * m


# ---------------------------------------------------------------------------
# Fused kernel: hyper heads (MXU) + per-sample dynamic MLP (packed 128-lane
# multiply-accumulates, multipliers built on the MXU via selection matmuls).
# ---------------------------------------------------------------------------
def _fused_h_critic_kernel(hin_ref, obs_ref, wh_ref, bh_ref, sel1_ref, sel2_ref,
                           out_ref, params_ref, *,
                           hidden, tile_rows, n_row_tiles, n_g1, n_g2,
                           off_w1, off_b1, off_w2, off_b2, off_w3, off_b3):
    H = hidden
    TR = tile_rows
    KPG = _LANES // H  # k-indices packed per 128-lane group

    # --- Hyper heads: the whole per-sample parameter slab for this batch
    #     block in one MXU matmul, written to the 128-aligned VMEM scratch.
    params_ref[...] = (
        jnp.dot(hin_ref[...], wh_ref[...], preferred_element_type=jnp.float32)
        + bh_ref[...])

    def row_tile(r):
        if isinstance(r, int):
            start = r * TR
        else:
            start = pl.multiple_of(r * TR, TR)
        row = pl.ds(start, TR)
        x = obs_ref[row, :]                                   # (TR, O)

        # --- Layer 1: h1 = relu(cent_obs @ w1 + b1), 128-lane packed.
        acc = jnp.zeros((TR, _LANES), jnp.float32)
        for g in range(n_g1):
            lo = off_w1 + g * _LANES
            # multiplier: x[b, k] replicated over the H lanes of each k-column
            m = jnp.dot(x, sel1_ref[:, g * _LANES:(g + 1) * _LANES],
                        preferred_element_type=jnp.float32)   # (TR, 128)
            acc = acc + m * params_ref[row, lo:lo + _LANES]
        h = params_ref[row, off_b1:off_b1 + H]                # (TR, H) bias
        for c in range(KPG):                                  # fold sub-groups
            h = h + acc[:, c * H:(c + 1) * H]
        h1 = jnp.maximum(h, 0.0)

        # --- Layer 2: h2 = relu(h1 @ w2 + b2), same packing.
        acc = jnp.zeros((TR, _LANES), jnp.float32)
        for g in range(n_g2):
            lo = off_w2 + g * _LANES
            m = jnp.dot(h1, sel2_ref[:, g * _LANES:(g + 1) * _LANES],
                        preferred_element_type=jnp.float32)   # (TR, 128)
            acc = acc + m * params_ref[row, lo:lo + _LANES]
        h = params_ref[row, off_b2:off_b2 + H]
        for c in range(KPG):
            h = h + acc[:, c * H:(c + 1) * H]
        h2 = jnp.maximum(h, 0.0)

        # --- Layer 3 (scalar value head): v = sum_j h2*w3 + b3.
        w3 = params_ref[row, off_w3:off_w3 + H]               # (TR, H)
        b3 = params_ref[row, off_b3:off_b3 + 1]               # (TR, 1)
        val = jnp.sum(h2 * w3, axis=-1, keepdims=True) + b3   # (TR, 1)

        # Lane-dense unmasked store; wrapper slices [:, :1].
        out_ref[row, :] = jnp.broadcast_to(val, (TR, out_ref.shape[1]))

    if n_row_tiles == 1:
        row_tile(0)                       # fully static indexing
    else:
        def body(r, carry):
            row_tile(r)
            return carry
        lax.fori_loop(0, n_row_tiles, body, 0)


# ---------------------------------------------------------------------------
# H_Critic forward (wrapper: concat / slab re-layout / batch blocking)
# ---------------------------------------------------------------------------
def h_critic_forward(pooled_node_emb, T, cent_obs, w_heads, b_heads,
                     *, hidden_size, out_dim=1, block_b=None):
    assert out_dim == 1, "H_Critic value head is scalar (out_dim == 1)."
    H = hidden_size
    assert 1 <= H <= _LANES and _LANES % H == 0, \
        "hidden_size must divide 128"  # TODO(synk): generalize packing for other H

    hyper_in = jnp.concatenate([pooled_node_emb, T], axis=-1).astype(jnp.float32)
    cent_obs = cent_obs.astype(jnp.float32)
    B, Hin = hyper_in.shape
    O = cent_obs.shape[-1]

    # --- 128-lane-aligned slab layout (section order matches the PyTorch
    #     module: w1 | b1 | w2 | b2 | w3 | b3, each section zero-padded to 128).
    sizes = [O * H, H, H * H, H, H * out_dim, out_dim]
    padded = [_round_up(s, _LANES) for s in sizes]
    offs, acc = [], 0
    for p in padded:
        offs.append(acc)
        acc += p
    P_pad = acc
    off_w1, off_b1, off_w2, off_b2, off_w3, off_b3 = offs
    P = sum(sizes)
    assert w_heads.shape == (Hin, P) and b_heads.shape == (P,)

    def split_pad(arr):
        segs, i = [], 0
        for s, p in zip(sizes, padded):
            seg = arr[..., i:i + s]
            if p > s:
                pad = [(0, 0)] * (arr.ndim - 1) + [(0, p - s)]
                seg = jnp.pad(seg, pad)     # zero-pad keeps extra lanes benign
            segs.append(seg)
            i += s
        return jnp.concatenate(segs, axis=-1)

    w_heads_p = split_pad(w_heads.astype(jnp.float32))                 # (Hin, P_pad)
    b_heads_p = split_pad(b_heads.astype(jnp.float32)).reshape(1, P_pad)

    # Block-selection matrices: sel[k, l] = 1 iff lane l of the (padded) weight
    # section belongs to input index k  (lane = k*H + j  =>  k = lane // H).
    n_g1 = padded[0] // _LANES
    n_g2 = padded[2] // _LANES
    sel1 = (jnp.arange(O)[:, None] ==
            (jnp.arange(padded[0]) // H)[None, :]).astype(jnp.float32)  # (O, n_g1*128)
    sel2 = (jnp.arange(H)[:, None] ==
            (jnp.arange(padded[2]) // H)[None, :]).astype(jnp.float32)  # (H, n_g2*128)

    # --- Batch blocking: blocks up to ~512 rows; >=2 grid steps when possible
    #     so v7x's two TensorCores both get work ("parallel" batch axis).
    if block_b is None:
        n_blocks = max(1, -(-B // 512))
        if B > 8:
            n_blocks = max(n_blocks, 2)
        TB = _round_up(-(-B // n_blocks), 8)
    else:
        TB = _round_up(block_b, 8)
    TR = math.gcd(TB, _LANES)            # MLP-phase row sub-tile (<=128 rows)
    n_row_tiles = TB // TR
    B_pad = _round_up(B, TB)
    if B_pad != B:
        hyper_in = jnp.pad(hyper_in, ((0, B_pad - B), (0, 0)))
        cent_obs = jnp.pad(cent_obs, ((0, B_pad - B), (0, 0)))

    kernel = functools.partial(
        _fused_h_critic_kernel, hidden=H, tile_rows=TR, n_row_tiles=n_row_tiles,
        n_g1=n_g1, n_g2=n_g2, off_w1=off_w1, off_b1=off_b1, off_w2=off_w2,
        off_b2=off_b2, off_w3=off_w3, off_b3=off_b3)

    cost = pl.CostEstimate(
        flops=2 * B_pad * (Hin * P_pad + O * padded[0] + H * padded[2]
                           + O * H + H * H + H),
        transcendentals=0,
        bytes_accessed=4 * (B_pad * (Hin + O + _LANES)
                            + Hin * P_pad + P_pad
                            + O * padded[0] + H * padded[2]),
    )

    out = pl.pallas_call(
        kernel,
        out_shape=jax.ShapeDtypeStruct((B_pad, _LANES), jnp.float32),
        grid=(B_pad // TB,),
        in_specs=[
            pl.BlockSpec((TB, Hin), lambda i: (i, 0)),          # hyper_in block
            pl.BlockSpec((TB, O), lambda i: (i, 0)),            # cent_obs block
            pl.BlockSpec((Hin, P_pad), lambda i: (0, 0)),       # hyper-head W (resident)
            pl.BlockSpec((1, P_pad), lambda i: (0, 0)),         # hyper-head b (resident)
            pl.BlockSpec((O, padded[0]), lambda i: (0, 0)),     # layer-1 selection (resident)
            pl.BlockSpec((H, padded[2]), lambda i: (0, 0)),     # layer-2 selection (resident)
        ],
        out_specs=pl.BlockSpec((TB, _LANES), lambda i: (i, 0)),
        scratch_shapes=[pltpu.VMEM((TB, P_pad), jnp.float32)],
        compiler_params=pltpu.CompilerParams(
            dimension_semantics=("parallel",)),
        cost_estimate=cost,
    )(hyper_in, cent_obs, w_heads_p, b_heads_p, sel1, sel2)

    return out[:B, :out_dim]                                    # [B, 1]


# ---------------------------------------------------------------------------
# Pure-JAX reference for verification.
# ---------------------------------------------------------------------------
def h_critic_reference(pooled_node_emb, T, cent_obs, w_heads, b_heads,
                       *, hidden_size, out_dim=1):
    hyper_in = jnp.concatenate([pooled_node_emb, T], axis=-1)
    B = hyper_in.shape[0]
    O = cent_obs.shape[-1]
    H = hidden_size
    A = out_dim
    params = hyper_in @ w_heads + b_heads
    i = 0
    w1 = params[:, i:i + O * H].reshape(B, O, H); i += O * H
    b1 = params[:, i:i + H];                      i += H
    w2 = params[:, i:i + H * H].reshape(B, H, H); i += H * H
    b2 = params[:, i:i + H];                      i += H
    w3 = params[:, i:i + H * A].reshape(B, H, A); i += H * A
    b3 = params[:, i:i + A];                      i += A
    h1 = jax.nn.relu(jnp.einsum("bo,boh->bh", cent_obs, w1) + b1)
    h2 = jax.nn.relu(jnp.einsum("bh,bhk->bk", h1, w2) + b2)
    return jnp.einsum("bh,bha->ba", h2, w3) + b3


if __name__ == "__main__":
    B = 4               # batch
    CENT_OBS_DIM = 16   # cent_obs_dim
    EMB_DIM = 8         # pooled node embedding dim
    T_DIM = 4           # time-feature dim
    HIDDEN = 32         # args.hidden_size (dynamic_hidden_dim)
    OUT_DIM = 1         # critic value head
    HYPER_IN = EMB_DIM + T_DIM

    P_TOTAL = (CENT_OBS_DIM * HIDDEN + HIDDEN
               + HIDDEN * HIDDEN + HIDDEN
               + HIDDEN * OUT_DIM + OUT_DIM)

    key = jax.random.PRNGKey(0)
    k = jax.random.split(key, 5)
    pooled_node_emb = jax.random.normal(k[0], (B, EMB_DIM), jnp.float32)
    T = jax.random.normal(k[1], (B, T_DIM), jnp.float32)
    cent_obs = jax.random.normal(k[2], (B, CENT_OBS_DIM), jnp.float32)

    # Deterministic synthetic hyper-head parameters (all heads concatenated,
    # same flattened layout as the PyTorch module).
    W_heads = 0.1 * jax.random.normal(k[3], (HYPER_IN, P_TOTAL), jnp.float32)
    b_heads = 0.1 * jax.random.normal(k[4], (P_TOTAL,), jnp.float32)

    fwd = jax.jit(functools.partial(h_critic_forward,
                                    hidden_size=HIDDEN, out_dim=OUT_DIM))
    values = jax.block_until_ready(
        fwd(pooled_node_emb, T, cent_obs, W_heads, b_heads))
    ref = h_critic_reference(pooled_node_emb, T, cent_obs, W_heads, b_heads,
                             hidden_size=HIDDEN, out_dim=OUT_DIM)
    assert values.shape == (B, OUT_DIM)
    assert jnp.allclose(values, ref, rtol=1e-4, atol=1e-4), (values, ref)

    # Check 2: larger, non-multiple batch with default blocking (>=2 grid
    # steps, "parallel" batch axis for v7x dual TensorCores).
    B2 = 20
    k2 = jax.random.split(jax.random.PRNGKey(1), 3)
    emb2 = jax.random.normal(k2[0], (B2, EMB_DIM), jnp.float32)
    T2 = jax.random.normal(k2[1], (B2, T_DIM), jnp.float32)
    obs2 = jax.random.normal(k2[2], (B2, CENT_OBS_DIM), jnp.float32)
    fwd2 = jax.jit(functools.partial(h_critic_forward,
                                     hidden_size=HIDDEN, out_dim=OUT_DIM))
    values2 = jax.block_until_ready(fwd2(emb2, T2, obs2, W_heads, b_heads))
    ref2 = h_critic_reference(emb2, T2, obs2, W_heads, b_heads,
                              hidden_size=HIDDEN, out_dim=OUT_DIM)
    assert values2.shape == (B2, OUT_DIM)
    assert jnp.allclose(values2, ref2, rtol=1e-4, atol=1e-4), (values2, ref2)

    # Check 3: explicit block size that exercises the inner fori_loop over
    # row sub-tiles (TB=24 -> TR=8, 3 sub-tiles) plus a multi-step grid.
    B3 = 40
    k3 = jax.random.split(jax.random.PRNGKey(2), 3)
    emb3 = jax.random.normal(k3[0], (B3, EMB_DIM), jnp.float32)
    T3 = jax.random.normal(k3[1], (B3, T_DIM), jnp.float32)
    obs3 = jax.random.normal(k3[2], (B3, CENT_OBS_DIM), jnp.float32)
    fwd3 = jax.jit(functools.partial(h_critic_forward,
                                     hidden_size=HIDDEN, out_dim=OUT_DIM,
                                     block_b=24))
    values3 = jax.block_until_ready(fwd3(emb3, T3, obs3, W_heads, b_heads))
    ref3 = h_critic_reference(emb3, T3, obs3, W_heads, b_heads,
                              hidden_size=HIDDEN, out_dim=OUT_DIM)
    assert values3.shape == (B3, OUT_DIM)
    assert jnp.allclose(values3, ref3, rtol=1e-4, atol=1e-4), (values3, ref3)

    print("KERNEL_OK")
</pallas_src>

<mosaic_0001>
module attributes {stable_mosaic.version = 11 : i64} {
  func.func @_fused_h_critic_kernel(%arg0: i32, %arg1: memref<8x12xf32, #tpu.memory_space<vmem>>, %arg2: memref<8x16xf32, #tpu.memory_space<vmem>>, %arg3: memref<12x2048xf32, #tpu.memory_space<vmem>>, %arg4: memref<1x2048xf32, #tpu.memory_space<vmem>>, %arg5: memref<16x512xf32, #tpu.memory_space<vmem>>, %arg6: memref<32x1024xf32, #tpu.memory_space<vmem>>, %arg7: memref<8x128xf32, #tpu.memory_space<vmem>>, %arg8: memref<8x2048xf32, #tpu.memory_space<vmem>>) attributes {dimension_semantics = [#tpu.dimension_semantics<parallel>], iteration_bounds = array<i64: 1>, scalar_prefetch = 0 : i64, scratch_operands = 1 : i64, tpu.core_type = #tpu.core_type<tc>, window_params = [{transform_indices = @transform_0, window_bounds = array<i64: 8, 12>}, {transform_indices = @transform_1, window_bounds = array<i64: 8, 16>}, {pipeline_mode = #tpu.pipeline_mode<synchronous>, transform_indices = @transform_2, window_bounds = array<i64: 12, 2048>}, {pipeline_mode = #tpu.pipeline_mode<synchronous>, transform_indices = @transform_3, window_bounds = array<i64: 1, 2048>}, {pipeline_mode = #tpu.pipeline_mode<synchronous>, transform_indices = @transform_4, window_bounds = array<i64: 16, 512>}, {pipeline_mode = #tpu.pipeline_mode<synchronous>, transform_indices = @transform_5, window_bounds = array<i64: 32, 1024>}, {transform_indices = @transform_6, window_bounds = array<i64: 8, 128>}]} {
    %c0 = arith.constant 0 : index
    %c0_0 = arith.constant 0 : index
    %0 = vector.load %arg1[%c0, %c0_0] : memref<8x12xf32, #tpu.memory_space<vmem>>, vector<8x12xf32>
    %c0_1 = arith.constant 0 : index
    %c0_2 = arith.constant 0 : index
    %1 = vector.load %arg3[%c0_1, %c0_2] : memref<12x2048xf32, #tpu.memory_space<vmem>>, vector<12x2048xf32>
    %cst = arith.constant dense<0.000000e+00> : vector<8x2048xf32>
    %2 = tpu.matmul %0, %1, %cst {dimension_numbers = #tpu.dot_dimension_numbers<[1], [0], [0], [1], [0, 0, 1, 1], [], []>} : vector<8x12xf32>, vector<12x2048xf32>, vector<8x2048xf32> -> vector<8x2048xf32>
    %c0_3 = arith.constant 0 : index
    %c0_4 = arith.constant 0 : index
    %3 = vector.load %arg4[%c0_3, %c0_4] : memref<1x2048xf32, #tpu.memory_space<vmem>>, vector<1x2048xf32>
    %4 = vector.broadcast %3 : vector<1x2048xf32> to vector<8x2048xf32>
    %5 = arith.addf %2, %4 : vector<8x2048xf32>
    %c0_5 = arith.constant 0 : index
    %c0_6 = arith.constant 0 : index
    %6 = vector.load %arg8[%c0_5, %c0_6] : memref<8x2048xf32, #tpu.memory_space<vmem>>, vector<8x2048xf32>
    tpu.vector_store %arg8[%c0_5, %c0_6], %5 {strides = array<i32>} : memref<8x2048xf32, #tpu.memory_space<vmem>>, vector<8x2048xf32>,
    %c0_7 = arith.constant 0 : index
    %c0_8 = arith.constant 0 : index
    %7 = vector.load %arg2[%c0_7, %c0_8] : memref<8x16xf32, #tpu.memory_space<vmem>>, vector<8x16xf32>
    %cst_9 = arith.constant 0.000000e+00 : f32
    %8 = vector.broadcast %cst_9 : f32 to vector<8x128xf32>
    %c0_10 = arith.constant 0 : index
    %c0_11 = arith.constant 0 : index
    %9 = vector.load %arg5[%c0_10, %c0_11] : memref<16x512xf32, #tpu.memory_space<vmem>>, vector<16x128xf32>
    %cst_12 = arith.constant dense<0.000000e+00> : vector<8x128xf32>
    %10 = tpu.matmul %7, %9, %cst_12 {dimension_numbers = #tpu.dot_dimension_numbers<[1], [0], [0], [1], [0, 0, 1, 1], [], []>} : vector<8x16xf32>, vector<16x128xf32>, vector<8x128xf32> -> vector<8x128xf32>
    %c0_13 = arith.constant 0 : index
    %c0_14 = arith.constant 0 : index
    %11 = vector.load %arg8[%c0_13, %c0_14] : memref<8x2048xf32, #tpu.memory_space<vmem>>, vector<8x128xf32>
    %12 = arith.mulf %10, %11 : vector<8x128xf32>
    %13 = arith.addf %8, %12 : vector<8x128xf32>
    %c0_15 = arith.constant 0 : index
    %c128 = arith.constant 128 : index
    %14 = vector.load %arg5[%c0_15, %c128] : memref<16x512xf32, #tpu.memory_space<vmem>>, vector<16x128xf32>
    %cst_16 = arith.constant dense<0.000000e+00> : vector<8x128xf32>
    %15 = tpu.matmul %7, %14, %cst_16 {dimension_numbers = #tpu.dot_dimension_numbers<[1], [0], [0], [1], [0, 0, 1, 1], [], []>} : vector<8x16xf32>, vector<16x128xf32>, vector<8x128xf32> -> vector<8x128xf32>
    %c0_17 = arith.constant 0 : index
    %c128_18 = arith.constant 128 : index
    %16 = vector.load %arg8[%c0_17, %c128_18] : memref<8x2048xf32, #tpu.memory_space<vmem>>, vector<8x128xf32>
    %17 = arith.mulf %15, %16 : vector<8x128xf32>
    %18 = arith.addf %13, %17 : vector<8x128xf32>
    %c0_19 = arith.constant 0 : index
    %c256 = arith.constant 256 : index
    %19 = vector.load %arg5[%c0_19, %c256] : memref<16x512xf32, #tpu.memory_space<vmem>>, vector<16x128xf32>
    %cst_20 = arith.constant dense<0.000000e+00> : vector<8x128xf32>
    %20 = tpu.matmul %7, %19, %cst_20 {dimension_numbers = #tpu.dot_dimension_numbers<[1], [0], [0], [1], [0, 0, 1, 1], [], []>} : vector<8x16xf32>, vector<16x128xf32>, vector<8x128xf32> -> vector<8x128xf32>
    %c0_21 = arith.constant 0 : index
    %c256_22 = arith.constant 256 : index
    %21 = vector.load %arg8[%c0_21, %c256_22] : memref<8x2048xf32, #tpu.memory_space<vmem>>, vector<8x128xf32>
    %22 = arith.mulf %20, %21 : vector<8x128xf32>
    %23 = arith.addf %18, %22 : vector<8x128xf32>
    %c0_23 = arith.constant 0 : index
    %c384 = arith.constant 384 : index
    %24 = vector.load %arg5[%c0_23, %c384] : memref<16x512xf32, #tpu.memory_space<vmem>>, vector<16x128xf32>
    %cst_24 = arith.constant dense<0.000000e+00> : vector<8x128xf32>
    %25 = tpu.matmul %7, %24, %cst_24 {dimension_numbers = #tpu.dot_dimension_numbers<[1], [0], [0], [1], [0, 0, 1, 1], [], []>} : vector<8x16xf32>, vector<16x128xf32>, vector<8x128xf32> -> vector<8x128xf32>
    %c0_25 = arith.constant 0 : index
    %c384_26 = arith.constant 384 : index
    %26 = vector.load %arg8[%c0_25, %c384_26] : memref<8x2048xf32, #tpu.memory_space<vmem>>, vector<8x128xf32>
    %27 = arith.mulf %25, %26 : vector<8x128xf32>
    %28 = arith.addf %23, %27 : vector<8x128xf32>
    %c0_27 = arith.constant 0 : index
    %c512 = arith.constant 512 : index
    %29 = vector.load %arg8[%c0_27, %c512] : memref<8x2048xf32, #tpu.memory_space<vmem>>, vector<8x32xf32>
    %30 = vector.extract_strided_slice %28 {offsets = [0, 0], sizes = [8, 32], strides = [1, 1]} : vector<8x128xf32> to vector<8x32xf32>
    %31 = arith.addf %29, %30 : vector<8x32xf32>
    %32 = vector.extract_strided_slice %28 {offsets = [0, 32], sizes = [8, 32], strides = [1, 1]} : vector<8x128xf32> to vector<8x32xf32>
    %33 = arith.addf %31, %32 : vector<8x32xf32>
    %34 = vector.extract_strided_slice %28 {offsets = [0, 64], sizes = [8, 32], strides = [1, 1]} : vector<8x128xf32> to vector<8x32xf32>
    %35 = arith.addf %33, %34 : vector<8x32xf32>
    %36 = vector.extract_strided_slice %28 {offsets = [0, 96], sizes = [8, 32], strides = [1, 1]} : vector<8x128xf32> to vector<8x32xf32>
    %37 = arith.addf %35, %36 : vector<8x32xf32>
    %cst_28 = arith.constant 0.000000e+00 : f32
    %38 = vector.broadcast %cst_28 : f32 to vector<8x32xf32>
    %39 = arith.maximumf %37, %38 : vector<8x32xf32>
    %cst_29 = arith.constant 0.000000e+00 : f32
    %40 = vector.broadcast %cst_29 : f32 to vector<8x128xf32>
    %c0_30 = arith.constant 0 : index
    %c0_31 = arith.constant 0 : index
    %41 = vector.load %arg6[%c0_30, %c0_31] : memref<32x1024xf32, #tpu.memory_space<vmem>>, vector<32x128xf32>
    %cst_32 = arith.constant dense<0.000000e+00> : vector<8x128xf32>
    %42 = tpu.matmul %39, %41, %cst_32 {dimension_numbers = #tpu.dot_dimension_numbers<[1], [0], [0], [1], [0, 0, 1, 1], [], []>} : vector<8x32xf32>, vector<32x128xf32>, vector<8x128xf32> -> vector<8x128xf32>
    %c0_33 = arith.constant 0 : index
    %c640 = arith.constant 640 : index
    %43 = vector.load %arg8[%c0_33, %c640] : memref<8x2048xf32, #tpu.memory_space<vmem>>, vector<8x128xf32>
    %44 = arith.mulf %42, %43 : vector<8x128xf32>
    %45 = arith.addf %40, %44 : vector<8x128xf32>
    %c0_34 = arith.constant 0 : index
    %c128_35 = arith.constant 128 : index
    %46 = vector.load %arg6[%c0_34, %c128_35] : memref<32x1024xf32, #tpu.memory_space<vmem>>, vector<32x128xf32>
    %cst_36 = arith.constant dense<0.000000e+00> : vector<8x128xf32>
    %47 = tpu.matmul %39, %46, %cst_36 {dimension_numbers = #tpu.dot_dimension_numbers<[1], [0], [0], [1], [0, 0, 1, 1], [], []>} : vector<8x32xf32>, vector<32x128xf32>, vector<8x128xf32> -> vector<8x128xf32>
    %c0_37 = arith.constant 0 : index
    %c768 = arith.constant 768 : index
    %48 = vector.load %arg8[%c0_37, %c768] : memref<8x2048xf32, #tpu.memory_space<vmem>>, vector<8x128xf32>
    %49 = arith.mulf %47, %48 : vector<8x128xf32>
    %50 = arith.addf %45, %49 : vector<8x128xf32>
    %c0_38 = arith.constant 0 : index
    %c256_39 = arith.constant 256 : index
    %51 = vector.load %arg6[%c0_38, %c256_39] : memref<32x1024xf32, #tpu.memory_space<vmem>>, vector<32x128xf32>
    %cst_40 = arith.constant dense<0.000000e+00> : vector<8x128xf32>
    %52 = tpu.matmul %39, %51, %cst_40 {dimension_numbers = #tpu.dot_dimension_numbers<[1], [0], [0], [1], [0, 0, 1, 1], [], []>} : vector<8x32xf32>, vector<32x128xf32>, vector<8x128xf32> -> vector<8x128xf32>
    %c0_41 = arith.constant 0 : index
    %c896 = arith.constant 896 : index
    %53 = vector.load %arg8[%c0_41, %c896] : memref<8x2048xf32, #tpu.memory_space<vmem>>, vector<8x128xf32>
    %54 = arith.mulf %52, %53 : vector<8x128xf32>
    %55 = arith.addf %50, %54 : vector<8x128xf32>
    %c0_42 = arith.constant 0 : index
    %c384_43 = arith.constant 384 : index
    %56 = vector.load %arg6[%c0_42, %c384_43] : memref<32x1024xf32, #tpu.memory_space<vmem>>, vector<32x128xf32>
    %cst_44 = arith.constant dense<0.000000e+00> : vector<8x128xf32>
    %57 = tpu.matmul %39, %56, %cst_44 {dimension_numbers = #tpu.dot_dimension_numbers<[1], [0], [0], [1], [0, 0, 1, 1], [], []>} : vector<8x32xf32>, vector<32x128xf32>, vector<8x128xf32> -> vector<8x128xf32>
    %c0_45 = arith.constant 0 : index
    %c1024 = arith.constant 1024 : index
    %58 = vector.load %arg8[%c0_45, %c1024] : memref<8x2048xf32, #tpu.memory_space<vmem>>, vector<8x128xf32>
    %59 = arith.mulf %57, %58 : vector<8x128xf32>
    %60 = arith.addf %55, %59 : vector<8x128xf32>
    %c0_46 = arith.constant 0 : index
    %c512_47 = arith.constant 512 : index
    %61 = vector.load %arg6[%c0_46, %c512_47] : memref<32x1024xf32, #tpu.memory_space<vmem>>, vector<32x128xf32>
    %cst_48 = arith.constant dense<0.000000e+00> : vector<8x128xf32>
    %62 = tpu.matmul %39, %61, %cst_48 {dimension_numbers = #tpu.dot_dimension_numbers<[1], [0], [0], [1], [0, 0, 1, 1], [], []>} : vector<8x32xf32>, vector<32x128xf32>, vector<8x128xf32> -> vector<8x128xf32>
    %c0_49 = arith.constant 0 : index
    %c1152 = arith.constant 1152 : index
    %63 = vector.load %arg8[%c0_49, %c1152] : memref<8x2048xf32, #tpu.memory_space<vmem>>, vector<8x128xf32>
    %64 = arith.mulf %62, %63 : vector<8x128xf32>
    %65 = arith.addf %60, %64 : vector<8x128xf32>
    %c0_50 = arith.constant 0 : index
    %c640_51 = arith.constant 640 : index
    %66 = vector.load %arg6[%c0_50, %c640_51] : memref<32x1024xf32, #tpu.memory_space<vmem>>, vector<32x128xf32>
    %cst_52 = arith.constant dense<0.000000e+00> : vector<8x128xf32>
    %67 = tpu.matmul %39, %66, %cst_52 {dimension_numbers = #tpu.dot_dimension_numbers<[1], [0], [0], [1], [0, 0, 1, 1], [], []>} : vector<8x32xf32>, vector<32x128xf32>, vector<8x128xf32> -> vector<8x128xf32>
    %c0_53 = arith.constant 0 : index
    %c1280 = arith.constant 1280 : index
    %68 = vector.load %arg8[%c0_53, %c1280] : memref<8x2048xf32, #tpu.memory_space<vmem>>, vector<8x128xf32>
    %69 = arith.mulf %67, %68 : vector<8x128xf32>
    %70 = arith.addf %65, %69 : vector<8x128xf32>
    %c0_54 = arith.constant 0 : index
    %c768_55 = arith.constant 768 : index
    %71 = vector.load %arg6[%c0_54, %c768_55] : memref<32x1024xf32, #tpu.memory_space<vmem>>, vector<32x128xf32>
    %cst_56 = arith.constant dense<0.000000e+00> : vector<8x128xf32>
    %72 = tpu.matmul %39, %71, %cst_56 {dimension_numbers = #tpu.dot_dimension_numbers<[1], [0], [0], [1], [0, 0, 1, 1], [], []>} : vector<8x32xf32>, vector<32x128xf32>, vector<8x128xf32> -> vector<8x128xf32>
    %c0_57 = arith.constant 0 : index
    %c1408 = arith.constant 1408 : index
    %73 = vector.load %arg8[%c0_57, %c1408] : memref<8x2048xf32, #tpu.memory_space<vmem>>, vector<8x128xf32>
    %74 = arith.mulf %72, %73 : vector<8x128xf32>
    %75 = arith.addf %70, %74 : vector<8x128xf32>
    %c0_58 = arith.constant 0 : index
    %c896_59 = arith.constant 896 : index
    %76 = vector.load %arg6[%c0_58, %c896_59] : memref<32x1024xf32, #tpu.memory_space<vmem>>, vector<32x128xf32>
    %cst_60 = arith.constant dense<0.000000e+00> : vector<8x128xf32>
    %77 = tpu.matmul %39, %76, %cst_60 {dimension_numbers = #tpu.dot_dimension_numbers<[1], [0], [0], [1], [0, 0, 1, 1], [], []>} : vector<8x32xf32>, vector<32x128xf32>, vector<8x128xf32> -> vector<8x128xf32>
    %c0_61 = arith.constant 0 : index
    %c1536 = arith.constant 1536 : index
    %78 = vector.load %arg8[%c0_61, %c1536] : memref<8x2048xf32, #tpu.memory_space<vmem>>, vector<8x128xf32>
    %79 = arith.mulf %77, %78 : vector<8x128xf32>
    %80 = arith.addf %75, %79 : vector<8x128xf32>
    %c0_62 = arith.constant 0 : index
    %c1664 = arith.constant 1664 : index
    %81 = vector.load %arg8[%c0_62, %c1664] : memref<8x2048xf32, #tpu.memory_space<vmem>>, vector<8x32xf32>
    %82 = vector.extract_strided_slice %80 {offsets = [0, 0], sizes = [8, 32], strides = [1, 1]} : vector<8x128xf32> to vector<8x32xf32>
    %83 = arith.addf %81, %82 : vector<8x32xf32>
    %84 = vector.extract_strided_slice %80 {offsets = [0, 32], sizes = [8, 32], strides = [1, 1]} : vector<8x128xf32> to vector<8x32xf32>
    %85 = arith.addf %83, %84 : vector<8x32xf32>
    %86 = vector.extract_strided_slice %80 {offsets = [0, 64], sizes = [8, 32], strides = [1, 1]} : vector<8x128xf32> to vector<8x32xf32>
    %87 = arith.addf %85, %86 : vector<8x32xf32>
    %88 = vector.extract_strided_slice %80 {offsets = [0, 96], sizes = [8, 32], strides = [1, 1]} : vector<8x128xf32> to vector<8x32xf32>
    %89 = arith.addf %87, %88 : vector<8x32xf32>
    %cst_63 = arith.constant 0.000000e+00 : f32
    %90 = vector.broadcast %cst_63 : f32 to vector<8x32xf32>
    %91 = arith.maximumf %89, %90 : vector<8x32xf32>
    %c0_64 = arith.constant 0 : index
    %c1792 = arith.constant 1792 : index
    %92 = vector.load %arg8[%c0_64, %c1792] : memref<8x2048xf32, #tpu.memory_space<vmem>>, vector<8x32xf32>
    %c0_65 = arith.constant 0 : index
    %c1920 = arith.constant 1920 : index
    %93 = vector.load %arg8[%c0_65, %c1920] : memref<8x2048xf32, #tpu.memory_space<vmem>>, vector<8x1xf32>
    %94 = arith.mulf %91, %92 : vector<8x32xf32>
    %cst_66 = arith.constant dense<0.000000e+00> : vector<8xf32>
    %95 = vector.multi_reduction <add>, %94, %cst_66 [1] : vector<8x32xf32> to vector<8xf32>
    %96 = vector.shape_cast %95 : vector<8xf32> to vector<8x1xf32>
    %97 = arith.addf %96, %93 : vector<8x1xf32>
    %98 = vector.shape_cast %97 : vector<8x1xf32> to vector<8x1xf32>
    %99 = vector.broadcast %98 : vector<8x1xf32> to vector<8x128xf32>
    %c0_67 = arith.constant 0 : index
    %c0_68 = arith.constant 0 : index
    %100 = vector.load %arg7[%c0_67, %c0_68] : memref<8x128xf32, #tpu.memory_space<vmem>>, vector<8x128xf32>
    tpu.vector_store %arg7[%c0_67, %c0_68], %99 {strides = array<i32>} : memref<8x128xf32, #tpu.memory_space<vmem>>, vector<8x128xf32>,
    return
  }
  func.func @transform_0(%arg0: i32) -> (i32, i32) {
    %c0_i32 = arith.constant 0 : i32
    %c0_i32_0 = arith.constant 0 : i32
    return %arg0, %c0_i32 : i32, i32
  }
  func.func @transform_1(%arg0: i32) -> (i32, i32) {
    %c0_i32 = arith.constant 0 : i32
    %c0_i32_0 = arith.constant 0 : i32
    return %arg0, %c0_i32 : i32, i32
  }
  func.func @transform_2(%arg0: i32) -> (i32, i32) {
    %c0_i32 = arith.constant 0 : i32
    %c0_i32_0 = arith.constant 0 : i32
    %c0_i32_1 = arith.constant 0 : i32
    return %c0_i32, %c0_i32_0 : i32, i32
  }
  func.func @transform_3(%arg0: i32) -> (i32, i32) {
    %c0_i32 = arith.constant 0 : i32
    %c0_i32_0 = arith.constant 0 : i32
    %c0_i32_1 = arith.constant 0 : i32
    return %c0_i32, %c0_i32_0 : i32, i32
  }
  func.func @transform_4(%arg0: i32) -> (i32, i32) {
    %c0_i32 = arith.constant 0 : i32
    %c0_i32_0 = arith.constant 0 : i32
    %c0_i32_1 = arith.constant 0 : i32
    return %c0_i32, %c0_i32_0 : i32, i32
  }
  func.func @transform_5(%arg0: i32) -> (i32, i32) {
    %c0_i32 = arith.constant 0 : i32
    %c0_i32_0 = arith.constant 0 : i32
    %c0_i32_1 = arith.constant 0 : i32
    return %c0_i32, %c0_i32_0 : i32, i32
  }
  func.func @transform_6(%arg0: i32) -> (i32, i32) {
    %c0_i32 = arith.constant 0 : i32
    %c0_i32_0 = arith.constant 0 : i32
    return %arg0, %c0_i32 : i32, i32
  }
}

</mosaic_0001>

<llo_original>
// kernel: custom-call
$region0: #{custom-call}
  %s0 = inlined_call_operand.vmem [shape: f32[2048], index: 0, kind: output, shape index: {}]

// kernel: h_critic_forward.1
$region0: #{h_critic_forward.1}
  #allocation0 [shape = 'u32[]', space=smem, size = 0x4, offset = 0x4, fixed_abs, tag = 'smem constant byte address 0x4 - core index']
  #allocation1 [shape = 'u32[144,128]{1,0:T(1,128)}', space=vmem, size = 0x12000, scoped, tag = 'internal scratch']
  #allocation2 [shape = 'f32[8,2048]{1,0:T(8,128)}', space=vmem, size = 0x10000, scoped, tag = 'scratch operand']
  %s0 = inlined_call_operand.vmem [shape: f32[8,12], index: 0, kind: input, shape index: {}]
  %s1 = inlined_call_operand.vmem [shape: f32[8,16], index: 1, kind: input, shape index: {}]
  %s2 = inlined_call_operand.vmem [shape: f32[12,2048], index: 2, kind: input, shape index: {}]
  %s3 = inlined_call_operand.vmem [shape: f32[1,2048], index: 3, kind: input, shape index: {}]
  %s4 = inlined_call_operand.vmem [shape: f32[16,512], index: 4, kind: input, shape index: {}]
  %s5 = inlined_call_operand.vmem [shape: f32[32,1024], index: 5, kind: input, shape index: {}]
  %s6 = inlined_call_operand.vmem [shape: f32[8,128], index: 6, kind: output, shape index: {}]
  %s7 = sld [smem:[#allocation0]]
  $region34: #{h_critic_forward.1} parent=0
    _
  %s9 = ssub.s32 1, %s7
  %s10 = scalar_select 0, %s9, %s7
  // Predicated region
  $region2: #{h_critic_forward.1} parent=0 // pred_check
    _
  $region3: #{h_critic_forward.1} parent=0 // pred_check_branch
    %12 = sbr.rel (0) target = $region5
  $region4: #{h_critic_forward.1} parent=0 // pred_region
    _
  $region5: #{h_critic_forward.1} parent=0 // pred_fallthru
    _
  // Predicated region
  $region6: #{h_critic_forward.1} parent=0 // pred_check
    _
  $region7: #{h_critic_forward.1} parent=0 // pred_check_branch
    %14 = sbr.rel (0) target = $region9
  $region8: #{h_critic_forward.1} parent=0 // pred_region
    _
  $region9: #{h_critic_forward.1} parent=0 // pred_fallthru
    _
  // Predicated region
  $region10: #{h_critic_forward.1} parent=0 // pred_check
    _
  $region11: #{h_critic_forward.1} parent=0 // pred_check_branch
    %16 = sbr.rel (0) target = $region13
  $region12: #{h_critic_forward.1} parent=0 // pred_region
    _
  $region13: #{h_critic_forward.1} parent=0 // pred_fallthru
    _
  // Predicated region
  $region14: #{h_critic_forward.1} parent=0 // pred_check
    _
  $region15: #{h_critic_forward.1} parent=0 // pred_check_branch
    %18 = sbr.rel (0) target = $region17
  $region16: #{h_critic_forward.1} parent=0 // pred_region
    _
  $region17: #{h_critic_forward.1} parent=0 // pred_fallthru
    _
  // Predicated region
  $region18: #{h_critic_forward.1} parent=0 // pred_check
    _
  $region19: #{h_critic_forward.1} parent=0 // pred_check_branch
    %20 = sbr.rel (0) target = $region21
  $region20: #{h_critic_forward.1} parent=0 // pred_region
    _
  $region21: #{h_critic_forward.1} parent=0 // pred_fallthru
    _
  // Predicated region
  $region22: #{h_critic_forward.1} parent=0 // pred_check
    _
  $region23: #{h_critic_forward.1} parent=0 // pred_check_branch
    %22 = sbr.rel (0) target = $region25
  $region24: #{h_critic_forward.1} parent=0 // pred_region
    _
  $region25: #{h_critic_forward.1} parent=0 // pred_fallthru
    _
  %v23 = vld [vmem:[%s0] sm:$0xff]
  %v24 = vld [vmem:[%s2] sm:$0xff]
  %v25 = vld [vmem:[%s2 + $0x8] sm:$0xff]
  %v26 = vld [vmem:[%s2 + $0x10] sm:$0xff]
  %v27 = vld [vmem:[%s2 + $0x18] sm:$0xff]
  %v28 = vld [vmem:[%s2 + $0x20] sm:$0xff]
  %v29 = vld [vmem:[%s2 + $0x28] sm:$0xff]
  %v30 = vld [vmem:[%s2 + $0x30] sm:$0xff]
  %v31 = vld [vmem:[%s2 + $0x38] sm:$0xff]
  %v32 = vld [vmem:[%s2 + $0x40] sm:$0xff]
  %v33 = vld [vmem:[%s2 + $0x48] sm:$0xff]
  %v34 = vld [vmem:[%s2 + $0x50] sm:$0xff]
  %v35 = vld [vmem:[%s2 + $0x58] sm:$0xff]
  %v36 = vld [vmem:[%s2 + $0x60] sm:$0xff]
  %v37 = vld [vmem:[%s2 + $0x68] sm:$0xff]
  %v38 = vld [vmem:[%s2 + $0x70] sm:$0xff]
  %v39 = vld [vmem:[%s2 + $0x78] sm:$0xff]
  %v40 = vld [vmem:[%s2 + $0x80] sm:$0xf]
  %v41 = vld [vmem:[%s2 + $0x88] sm:$0xf]
  %v42 = vld [vmem:[%s2 + $0x90] sm:$0xf]
  %v43 = vld [vmem:[%s2 + $0x98] sm:$0xf]
  %v44 = vld [vmem:[%s2 + $0xa0] sm:$0xf]
  %v45 = vld [vmem:[%s2 + $0xa8] sm:$0xf]
  %v46 = vld [vmem:[%s2 + $0xb0] sm:$0xf]
  %v47 = vld [vmem:[%s2 + $0xb8] sm:$0xf]
  %v48 = vld [vmem:[%s2 + $0xc0] sm:$0xf]
  %v49 = vld [vmem:[%s2 + $0xc8] sm:$0xf]
  %v50 = vld [vmem:[%s2 + $0xd0] sm:$0xf]
  %v51 = vld [vmem:[%s2 + $0xd8] sm:$0xf]
  %v52 = vld [vmem:[%s2 + $0xe0] sm:$0xf]
  %v53 = vld [vmem:[%s2 + $0xe8] sm:$0xf]
  %v54 = vld [vmem:[%s2 + $0xf0] sm:$0xf]
  %v55 = vld [vmem:[%s2 + $0xf8] sm:$0xf]
  %v56 = vld [vmem:[%s3] sm:$0xff]
  %v57 = vld [vmem:[%s3 + $0x8] sm:$0xff]
  %v60 = vlaneseq
  %v61 = vshrl.u32 %v60, 7
  %v62 = vsub.s32 0, %v61
  %v63 = vrot.slane %v56, %v62
  %v64 = vlaneseq
  %v65 = vshrl.u32 %v64, 7
  %v66 = vsub.s32 1, %v65
  %v67 = vrot.slane %v56, %v66
  %v68 = vlaneseq
  %v69 = vshrl.u32 %v68, 7
  %v70 = vsub.s32 2, %v69
  %v71 = vrot.slane %v56, %v70
  %v72 = vlaneseq
  %v73 = vshrl.u32 %v72, 7
  %v74 = vsub.s32 3, %v73
  %v75 = vrot.slane %v56, %v74
  %v76 = vlaneseq
  %v77 = vshrl.u32 %v76, 7
  %v78 = vsub.s32 4, %v77
  %v79 = vrot.slane %v56, %v78
  %v80 = vlaneseq
  %v81 = vshrl.u32 %v80, 7
  %v82 = vsub.s32 5, %v81
  %v83 = vrot.slane %v56, %v82
  %v84 = vlaneseq
  %v85 = vshrl.u32 %v84, 7
  %v86 = vsub.s32 6, %v85
  %v87 = vrot.slane %v56, %v86
  %v88 = vlaneseq
  %v89 = vshrl.u32 %v88, 7
  %v90 = vsub.s32 7, %v89
  %v91 = vrot.slane %v56, %v90
  %v92 = vlaneseq
  %v93 = vshrl.u32 %v92, 7
  %v94 = vsub.s32 0, %v93
  %v95 = vrot.slane %v57, %v94
  %v96 = vlaneseq
  %v97 = vshrl.u32 %v96, 7
  %v98 = vsub.s32 1, %v97
  %v99 = vrot.slane %v57, %v98
  %v100 = vlaneseq
  %v101 = vshrl.u32 %v100, 7
  %v102 = vsub.s32 2, %v101
  %v103 = vrot.slane %v57, %v102
  %v104 = vlaneseq
  %v105 = vshrl.u32 %v104, 7
  %v106 = vsub.s32 3, %v105
  %v107 = vrot.slane %v57, %v106
  %v108 = vlaneseq
  %v109 = vshrl.u32 %v108, 7
  %v110 = vsub.s32 4, %v109
  %v111 = vrot.slane %v57, %v110
  %v112 = vlaneseq
  %v113 = vshrl.u32 %v112, 7
  %v114 = vsub.s32 5, %v113
  %v115 = vrot.slane %v57, %v114
  %v116 = vlaneseq
  %v117 = vshrl.u32 %v116, 7
  %v118 = vsub.s32 6, %v117
  %v119 = vrot.slane %v57, %v118
  %v120 = vlaneseq
  %v121 = vshrl.u32 %v120, 7
  %v122 = vsub.s32 7, %v121
  %v123 = vrot.slane %v57, %v122
  %vm140 = vcmask 97280
  %v142 = vsel %vm140, %v23, 0
  %vm144 = vcmask 1043456
  %v146 = vsel %vm144, %v40, 0
  %v149 = vsel %vm144, %v41, 0
  %v152 = vsel %vm144, %v42, 0
  %v155 = vsel %vm144, %v43, 0
  %v158 = vsel %vm144, %v44, 0
  %v161 = vsel %vm144, %v45, 0
  %v164 = vsel %vm144, %v46, 0
  %v167 = vsel %vm144, %v47, 0
  %v170 = vsel %vm144, %v48, 0
  %v173 = vsel %vm144, %v49, 0
  %v176 = vsel %vm144, %v50, 0
  %v179 = vsel %vm144, %v51, 0
  %v182 = vsel %vm144, %v52, 0
  %v185 = vsel %vm144, %v53, 0
  %v188 = vsel %vm144, %v54, 0
  %v191 = vsel %vm144, %v55, 0
  %193 = vmatprep.subr.mxu0 %v25
  %194 = vmatpush1.msra.mxu0 %v24
  %195 = vmatprep.subr.mxu0 %v149
  %196 = vmatpush1.msra.mxu0 %v146
  %197 = vmatprep.subr.mxu0 0.0
  %198 = vmatpush1.msra.mxu0 0.0
  %199 = vmatprep.subr.mxu0 0.0
  %200 = vmatpush1.msra.mxu0 0.0
  %201 = vmatprep.subr.mxu0 0.0
  %202 = vmatpush1.msra.mxu0 0.0
  %203 = vmatprep.subr.mxu0 0.0
  %204 = vmatpush1.msra.mxu0 0.0
  %205 = vmatprep.subr.mxu0 0.0
  %206 = vmatpush1.msra.mxu0 0.0
  %207 = vmatprep.subr.mxu0 0.0
  %208 = vmatpush1.msra.mxu0 0.0
  %209 = vmatprep.subr.mxu0 0.0
  %210 = vmatpush1.msra.mxu0 0.0
  %211 = vmatprep.subr.mxu0 0.0
  %212 = vmatpush1.msra.mxu0 0.0
  %213 = vmatprep.subr.mxu0 0.0
  %214 = vmatpush1.msra.mxu0 0.0
  %215 = vmatprep.subr.mxu0 0.0
  %216 = vmatpush1.msra.mxu0 0.0
  %217 = vmatprep.subr.mxu0 0.0
  %218 = vmatpush1.msra.mxu0 0.0
  %219 = vmatprep.subr.mxu0 0.0
  %220 = vmatpush1.msra.mxu0 0.0
  %221 = vmatprep.subr.mxu0 0.0
  %222 = vmatpush1.msra.mxu0 0.0
  %223 = vmatprep.subr.mxu0 0.0
  %224 = vmatpush1.msra.mxu0 0.0
  %225 = vmatprep.subr.mxu0 0.0
  %226 = vmatpush1.msra.mxu0 0.0
  %227 = vmatprep.subr.mxu0 0.0
  %228 = vmatpush1.msra.mxu0 0.0
  %229 = vmatprep.subr.mxu0 0.0
  %230 = vmatpush1.msra.mxu0 0.0
  %231 = vmatprep.subr.mxu0 0.0
  %232 = vmatpush1.msra.mxu0 0.0
  %233 = vmatprep.subr.mxu0 0.0
  %234 = vmatpush1.msra.mxu0 0.0
  %235 = vmatprep.subr.mxu0 0.0
  %236 = vmatpush1.msra.mxu0 0.0
  %237 = vmatprep.subr.mxu0 0.0
  %238 = vmatpush1.msra.mxu0 0.0
  %239 = vmatprep.subr.mxu0 0.0
  %240 = vmatpush1.msra.mxu0 0.0
  %241 = vmatprep.subr.mxu0 0.0
  %242 = vmatpush1.msra.mxu0 0.0
  %243 = vmatprep.subr.mxu0 0.0
  %244 = vmatpush1.msra.mxu0 0.0
  %245 = vmatprep.subr.mxu0 0.0
  %246 = vmatpush1.msra.mxu0 0.0
  %247 = vmatprep.subr.mxu0 0.0
  %248 = vmatpush1.msra.mxu0 0.0
  %249 = vmatprep.subr.mxu0 0.0
  %250 = vmatpush1.msra.mxu0 0.0
  %251 = vmatprep.subr.mxu0 0.0
  %252 = vmatpush1.msra.mxu0 0.0
  %253 = vmatprep.subr.mxu0 0.0
  %254 = vmatpush1.msra.mxu0 0.0
  %255 = vmatprep.subr.mxu0 0.0
  %256 = vmatpush1.msra.mxu0 0.0
  %257 = vmatprep.mubr.f32.mxu0 0.0
  %258 = vmatmul.mubr.f32.gmra.mrb[0].mxu0 %v142
  %v259 = vpop.f32.mrb[0].mxu0
  %v260 = vadd.f32 %v63, %v259
  %v261 = vpop.f32.mrb[0].mxu0
  %v262 = vadd.f32 %v67, %v261
  %263 = vdwg.mxu0
  %264 = vmatprep.subr.mxu0 %v27
  %265 = vmatpush1.msra.mxu0 %v26
  %266 = vmatprep.subr.mxu0 %v155
  %267 = vmatpush1.msra.mxu0 %v152
  %268 = vmatprep.subr.mxu0 0.0
  %269 = vmatpush1.msra.mxu0 0.0
  %270 = vmatprep.subr.mxu0 0.0
  %271 = vmatpush1.msra.mxu0 0.0
  %272 = vmatprep.subr.mxu0 0.0
  %273 = vmatpush1.msra.mxu0 0.0
  %274 = vmatprep.subr.mxu0 0.0
  %275 = vmatpush1.msra.mxu0 0.0
  %276 = vmatprep.subr.mxu0 0.0
  %277 = vmatpush1.msra.mxu0 0.0
  %278 = vmatprep.subr.mxu0 0.0
  %279 = vmatpush1.msra.mxu0 0.0
  %280 = vmatprep.subr.mxu0 0.0
  %281 = vmatpush1.msra.mxu0 0.0
  %282 = vmatprep.subr.mxu0 0.0
  %283 = vmatpush1.msra.mxu0 0.0
  %284 = vmatprep.subr.mxu0 0.0
  %285 = vmatpush1.msra.mxu0 0.0
  %286 = vmatprep.subr.mxu0 0.0
  %287 = vmatpush1.msra.mxu0 0.0
  %288 = vmatprep.subr.mxu0 0.0
  %289 = vmatpush1.msra.mxu0 0.0
  %290 = vmatprep.subr.mxu0 0.0
  %291 = vmatpush1.msra.mxu0 0.0
  %292 = vmatprep.subr.mxu0 0.0
  %293 = vmatpush1.msra.mxu0 0.0
  %294 = vmatprep.subr.mxu0 0.0
  %295 = vmatpush1.msra.mxu0 0.0
  %296 = vmatprep.subr.mxu0 0.0
  %297 = vmatpush1.msra.mxu0 0.0
  %298 = vmatprep.subr.mxu0 0.0
  %299 = vmatpush1.msra.mxu0 0.0
  %300 = vmatprep.subr.mxu0 0.0
  %301 = vmatpush1.msra.mxu0 0.0
  %302 = vmatprep.subr.mxu0 0.0
  %303 = vmatpush1.msra.mxu0 0.0
  %304 = vmatprep.subr.mxu0 0.0
  %305 = vmatpush1.msra.mxu0 0.0
  %306 = vmatprep.subr.mxu0 0.0
  %307 = vmatpush1.msra.mxu0 0.0
  %308 = vmatprep.subr.mxu0 0.0
  %309 = vmatpush1.msra.mxu0 0.0
  %310 = vmatprep.subr.mxu0 0.0
  %311 = vmatpush1.msra.mxu0 0.0
  %312 = vmatprep.subr.mxu0 0.0
  %313 = vmatpush1.msra.mxu0 0.0
  %314 = vmatprep.subr.mxu0 0.0
  %315 = vmatpush1.msra.mxu0 0.0
  %316 = vmatprep.subr.mxu0 0.0
  %317 = vmatpush1.msra.mxu0 0.0
  %318 = vmatprep.subr.mxu0 0.0
  %319 = vmatpush1.msra.mxu0 0.0
  %320 = vmatprep.subr.mxu0 0.0
  %321 = vmatpush1.msra.mxu0 0.0
  %322 = vmatprep.subr.mxu0 0.0
  %323 = vmatpush1.msra.mxu0 0.0
  %324 = vmatprep.subr.mxu0 0.0
  %325 = vmatpush1.msra.mxu0 0.0
  %326 = vmatprep.subr.mxu0 0.0
  %327 = vmatpush1.msra.mxu0 0.0
  %328 = vmatprep.mubr.f32.mxu0 0.0
  %329 = vmatmul.mubr.f32.gmra.mrb[0].mxu0 %v142
  %v330 = vpop.f32.mrb[0].mxu0
  %v331 = vadd.f32 %v71, %v330
  %v332 = vpop.f32.mrb[0].mxu0
  %v333 = vadd.f32 %v75, %v332
  %334 = vdwg.mxu0
  %335 = vmatprep.subr.mxu0 %v29
  %336 = vmatpush1.msra.mxu0 %v28
  %337 = vmatprep.subr.mxu0 %v161
  %338 = vmatpush1.msra.mxu0 %v158
  %339 = vmatprep.subr.mxu0 0.0
  %340 = vmatpush1.msra.mxu0 0.0
  %341 = vmatprep.subr.mxu0 0.0
  %342 = vmatpush1.msra.mxu0 0.0
  %343 = vmatprep.subr.mxu0 0.0
  %344 = vmatpush1.msra.mxu0 0.0
  %345 = vmatprep.subr.mxu0 0.0
  %346 = vmatpush1.msra.mxu0 0.0
  %347 = vmatprep.subr.mxu0 0.0
  %348 = vmatpush1.msra.mxu0 0.0
  %349 = vmatprep.subr.mxu0 0.0
  %350 = vmatpush1.msra.mxu0 0.0
  %351 = vmatprep.subr.mxu0 0.0
  %352 = vmatpush1.msra.mxu0 0.0
  %353 = vmatprep.subr.mxu0 0.0
  %354 = vmatpush1.msra.mxu0 0.0
  %355 = vmatprep.subr.mxu0 0.0
  %356 = vmatpush1.msra.mxu0 0.0
  %357 = vmatprep.subr.mxu0 0.0
  %358 = vmatpush1.msra.mxu0 0.0
  %359 = vmatprep.subr.mxu0 0.0
  %360 = vmatpush1.msra.mxu0 0.0
  %361 = vmatprep.subr.mxu0 0.0
  %362 = vmatpush1.msra.mxu0 0.0
  %363 = vmatprep.subr.mxu0 0.0
  %364 = vmatpush1.msra.mxu0 0.0
  %365 = vmatprep.subr.mxu0 0.0
  %366 = vmatpush1.msra.mxu0 0.0
  %367 = vmatprep.subr.mxu0 0.0
  %368 = vmatpush1.msra.mxu0 0.0
  %369 = vmatprep.subr.mxu0 0.0
  %370 = vmatpush1.msra.mxu0 0.0
  %371 = vmatprep.subr.mxu0 0.0
  %372 = vmatpush1.msra.mxu0 0.0
  %373 = vmatprep.subr.mxu0 0.0
  %374 = vmatpush1.msra.mxu0 0.0
  %375 = vmatprep.subr.mxu0 0.0
  %376 = vmatpush1.msra.mxu0 0.0
  %377 = vmatprep.subr.mxu0 0.0
  %378 = vmatpush1.msra.mxu0 0.0
  %379 = vmatprep.subr.mxu0 0.0
  %380 = vmatpush1.msra.mxu0 0.0
  %381 = vmatprep.subr.mxu0 0.0
  %382 = vmatpush1.msra.mxu0 0.0
  %383 = vmatprep.subr.mxu0 0.0
  %384 = vmatpush1.msra.mxu0 0.0
  %385 = vmatprep.subr.mxu0 0.0
  %386 = vmatpush1.msra.mxu0 0.0
  %387 = vmatprep.subr.mxu0 0.0
  %388 = vmatpush1.msra.mxu0 0.0
  %389 = vmatprep.subr.mxu0 0.0
  %390 = vmatpush1.msra.mxu0 0.0
  %391 = vmatprep.subr.mxu0 0.0
  %392 = vmatpush1.msra.mxu0 0.0
  %393 = vmatprep.subr.mxu0 0.0
  %394 = vmatpush1.msra.mxu0 0.0
  %395 = vmatprep.subr.mxu0 0.0
  %396 = vmatpush1.msra.mxu0 0.0
  %397 = vmatprep.subr.mxu0 0.0
  %398 = vmatpush1.msra.mxu0 0.0
  %399 = vmatprep.mubr.f32.mxu0 0.0
  %400 = vmatmul.mubr.f32.gmra.mrb[0].mxu0 %v142
  %v401 = vpop.f32.mrb[0].mxu0
  %v402 = vadd.f32 %v79, %v401
  %v403 = vpop.f32.mrb[0].mxu0
  %v404 = vadd.f32 %v83, %v403
  %405 = vdwg.mxu0
  %406 = vmatprep.subr.mxu0 %v31
  %407 = vmatpush1.msra.mxu0 %v30
  %408 = vmatprep.subr.mxu0 %v167
  %409 = vmatpush1.msra.mxu0 %v164
  %410 = vmatprep.subr.mxu0 0.0
  %411 = vmatpush1.msra.mxu0 0.0
  %412 = vmatprep.subr.mxu0 0.0
  %413 = vmatpush1.msra.mxu0 0.0
  %414 = vmatprep.subr.mxu0 0.0
  %415 = vmatpush1.msra.mxu0 0.0
  %416 = vmatprep.subr.mxu0 0.0
  %417 = vmatpush1.msra.mxu0 0.0
  %418 = vmatprep.subr.mxu0 0.0
  %419 = vmatpush1.msra.mxu0 0.0
  %420 = vmatprep.subr.mxu0 0.0
  %421 = vmatpush1.msra.mxu0 0.0
  %422 = vmatprep.subr.mxu0 0.0
  %423 = vmatpush1.msra.mxu0 0.0
  %424 = vmatprep.subr.mxu0 0.0
  %425 = vmatpush1.msra.mxu0 0.0
  %426 = vmatprep.subr.mxu0 0.0
  %427 = vmatpush1.msra.mxu0 0.0
  %428 = vmatprep.subr.mxu0 0.0
  %429 = vmatpush1.msra.mxu0 0.0
  %430 = vmatprep.subr.mxu0 0.0
  %431 = vmatpush1.msra.mxu0 0.0
  %432 = vmatprep.subr.mxu0 0.0
  %433 = vmatpush1.msra.mxu0 0.0
  %434 = vmatprep.subr.mxu0 0.0
  %435 = vmatpush1.msra.mxu0 0.0
  %436 = vmatprep.subr.mxu0 0.0
  %437 = vmatpush1.msra.mxu0 0.0
  %438 = vmatprep.subr.mxu0 0.0
  %439 = vmatpush1.msra.mxu0 0.0
  %440 = vmatprep.subr.mxu0 0.0
  %441 = vmatpush1.msra.mxu0 0.0
  %442 = vmatprep.subr.mxu0 0.0
  %443 = vmatpush1.msra.mxu0 0.0
  %444 = vmatprep.subr.mxu0 0.0
  %445 = vmatpush1.msra.mxu0 0.0
  %446 = vmatprep.subr.mxu0 0.0
  %447 = vmatpush1.msra.mxu0 0.0
  %448 = vmatprep.subr.mxu0 0.0
  %449 = vmatpush1.msra.mxu0 0.0
  %450 = vmatprep.subr.mxu0 0.0
  %451 = vmatpush1.msra.mxu0 0.0
  %452 = vmatprep.subr.mxu0 0.0
  %453 = vmatpush1.msra.mxu0 0.0
  %454 = vmatprep.subr.mxu0 0.0
  %455 = vmatpush1.msra.mxu0 0.0
  %456 = vmatprep.subr.mxu0 0.0
  %457 = vmatpush1.msra.mxu0 0.0
  %458 = vmatprep.subr.mxu0 0.0
  %459 = vmatpush1.msra.mxu0 0.0
  %460 = vmatprep.subr.mxu0 0.0
  %461 = vmatpush1.msra.mxu0 0.0
  %462 = vmatprep.subr.mxu0 0.0
  %463 = vmatpush1.msra.mxu0 0.0
  %464 = vmatprep.subr.mxu0 0.0
  %465 = vmatpush1.msra.mxu0 0.0
  %466 = vmatprep.subr.mxu0 0.0
  %467 = vmatpush1.msra.mxu0 0.0
  %468 = vmatprep.subr.mxu0 0.0
  %469 = vmatpush1.msra.mxu0 0.0
  %470 = vmatprep.mubr.f32.mxu0 0.0
  %471 = vmatmul.mubr.f32.gmra.mrb[0].mxu0 %v142
  %v472 = vpop.f32.mrb[0].mxu0
  %v473 = vadd.f32 %v87, %v472
  %v474 = vpop.f32.mrb[0].mxu0
  %v475 = vadd.f32 %v91, %v474
  %476 = vdwg.mxu0
  %477 = vmatprep.subr.mxu0 %v33
  %478 = vmatpush1.msra.mxu0 %v32
  %479 = vmatprep.subr.mxu0 %v173
  %480 = vmatpush1.msra.mxu0 %v170
  %481 = vmatprep.subr.mxu0 0.0
  %482 = vmatpush1.msra.mxu0 0.0
  %483 = vmatprep.subr.mxu0 0.0
  %484 = vmatpush1.msra.mxu0 0.0
  %485 = vmatprep.subr.mxu0 0.0
  %486 = vmatpush1.msra.mxu0 0.0
  %487 = vmatprep.subr.mxu0 0.0
  %488 = vmatpush1.msra.mxu0 0.0
  %489 = vmatprep.subr.mxu0 0.0
  %490 = vmatpush1.msra.mxu0 0.0
  %491 = vmatprep.subr.mxu0 0.0
  %492 = vmatpush1.msra.mxu0 0.0
  %493 = vmatprep.subr.mxu0 0.0
  %494 = vmatpush1.msra.mxu0 0.0
  %495 = vmatprep.subr.mxu0 0.0
  %496 = vmatpush1.msra.mxu0 0.0
  %497 = vmatprep.subr.mxu0 0.0
  %498 = vmatpush1.msra.mxu0 0.0
  %499 = vmatprep.subr.mxu0 0.0
  %500 = vmatpush1.msra.mxu0 0.0
  %501 = vmatprep.subr.mxu0 0.0
  %502 = vmatpush1.msra.mxu0 0.0
  %503 = vmatprep.subr.mxu0 0.0
  %504 = vmatpush1.msra.mxu0 0.0
  %505 = vmatprep.subr.mxu0 0.0
  %506 = vmatpush1.msra.mxu0 0.0
  %507 = vmatprep.subr.mxu0 0.0
  %508 = vmatpush1.msra.mxu0 0.0
  %509 = vmatprep.subr.mxu0 0.0
  %510 = vmatpush1.msra.mxu0 0.0
  %511 = vmatprep.subr.mxu0 0.0
  %512 = vmatpush1.msra.mxu0 0.0
  %513 = vmatprep.subr.mxu0 0.0
  %514 = vmatpush1.msra.mxu0 0.0
  %515 = vmatprep.subr.mxu0 0.0
  %516 = vmatpush1.msra.mxu0 0.0
  %517 = vmatprep.subr.mxu0 0.0
  %518 = vmatpush1.msra.mxu0 0.0
  %519 = vmatprep.subr.mxu0 0.0
  %520 = vmatpush1.msra.mxu0 0.0
  %521 = vmatprep.subr.mxu0 0.0
  %522 = vmatpush1.msra.mxu0 0.0
  %523 = vmatprep.subr.mxu0 0.0
  %524 = vmatpush1.msra.mxu0 0.0
  %525 = vmatprep.subr.mxu0 0.0
  %526 = vmatpush1.msra.mxu0 0.0
  %527 = vmatprep.subr.mxu0 0.0
  %528 = vmatpush1.msra.mxu0 0.0
  %529 = vmatprep.subr.mxu0 0.0
  %530 = vmatpush1.msra.mxu0 0.0
  %531 = vmatprep.subr.mxu0 0.0
  %532 = vmatpush1.msra.mxu0 0.0
  %533 = vmatprep.subr.mxu0 0.0
  %534 = vmatpush1.msra.mxu0 0.0
  %535 = vmatprep.subr.mxu0 0.0
  %536 = vmatpush1.msra.mxu0 0.0
  %537 = vmatprep.subr.mxu0 0.0
  %538 = vmatpush1.msra.mxu0 0.0
  %539 = vmatprep.subr.mxu0 0.0
  %540 = vmatpush1.msra.mxu0 0.0
  %541 = vmatprep.mubr.f32.mxu0 0.0
  %542 = vmatmul.mubr.f32.gmra.mrb[0].mxu0 %v142
  %v543 = vpop.f32.mrb[0].mxu0
  %v544 = vadd.f32 %v95, %v543
  %v545 = vpop.f32.mrb[0].mxu0
  %v546 = vadd.f32 %v99, %v545
  %547 = vdwg.mxu0
  %548 = vmatprep.subr.mxu0 %v35
  %549 = vmatpush1.msra.mxu0 %v34
  %550 = vmatprep.subr.mxu0 %v179
  %551 = vmatpush1.msra.mxu0 %v176
  %552 = vmatprep.subr.mxu0 0.0
  %553 = vmatpush1.msra.mxu0 0.0
  %554 = vmatprep.subr.mxu0 0.0
  %555 = vmatpush1.msra.mxu0 0.0
  %556 = vmatprep.subr.mxu0 0.0
  %557 = vmatpush1.msra.mxu0 0.0
  %558 = vmatprep.subr.mxu0 0.0
  %559 = vmatpush1.msra.mxu0 0.0
  %560 = vmatprep.subr.mxu0 0.0
  %561 = vmatpush1.msra.mxu0 0.0
  %562 = vmatprep.subr.mxu0 0.0
  %563 = vmatpush1.msra.mxu0 0.0
  %564 = vmatprep.subr.mxu0 0.0
  %565 = vmatpush1.msra.mxu0 0.0
  %566 = vmatprep.subr.mxu0 0.0
  %567 = vmatpush1.msra.mxu0 0.0
  %568 = vmatprep.subr.mxu0 0.0
  %569 = vmatpush1.msra.mxu0 0.0
  %570 = vmatprep.subr.mxu0 0.0
  %571 = vmatpush1.msra.mxu0 0.0
  %572 = vmatprep.subr.mxu0 0.0
  %573 = vmatpush1.msra.mxu0 0.0
  %574 = vmatprep.subr.mxu0 0.0
  %575 = vmatpush1.msra.mxu0 0.0
  %576 = vmatprep.subr.mxu0 0.0
  %577 = vmatpush1.msra.mxu0 0.0
  %578 = vmatprep.subr.mxu0 0.0
  %579 = vmatpush1.msra.mxu0 0.0
  %580 = vmatprep.subr.mxu0 0.0
  %581 = vmatpush1.msra.mxu0 0.0
  %582 = vmatprep.subr.mxu0 0.0
  %583 = vmatpush1.msra.mxu0 0.0
  %584 = vmatprep.subr.mxu0 0.0
  %585 = vmatpush1.msra.mxu0 0.0
  %586 = vmatprep.subr.mxu0 0.0
  %587 = vmatpush1.msra.mxu0 0.0
  %588 = vmatprep.subr.mxu0 0.0
  %589 = vmatpush1.msra.mxu0 0.0
  %590 = vmatprep.subr.mxu0 0.0
  %591 = vmatpush1.msra.mxu0 0.0
  %592 = vmatprep.subr.mxu0 0.0
  %593 = vmatpush1.msra.mxu0 0.0
  %594 = vmatprep.subr.mxu0 0.0
  %595 = vmatpush1.msra.mxu0 0.0
  %596 = vmatprep.subr.mxu0 0.0
  %597 = vmatpush1.msra.mxu0 0.0
  %598 = vmatprep.subr.mxu0 0.0
  %599 = vmatpush1.msra.mxu0 0.0
  %600 = vmatprep.subr.mxu0 0.0
  %601 = vmatpush1.msra.mxu0 0.0
  %602 = vmatprep.subr.mxu0 0.0
  %603 = vmatpush1.msra.mxu0 0.0
  %604 = vmatprep.subr.mxu0 0.0
  %605 = vmatpush1.msra.mxu0 0.0
  %606 = vmatprep.subr.mxu0 0.0
  %607 = vmatpush1.msra.mxu0 0.0
  %608 = vmatprep.subr.mxu0 0.0
  %609 = vmatpush1.msra.mxu0 0.0
  %610 = vmatprep.subr.mxu0 0.0
  %611 = vmatpush1.msra.mxu0 0.0
  %612 = vmatprep.mubr.f32.mxu0 0.0
  %613 = vmatmul.mubr.f32.gmra.mrb[0].mxu0 %v142
  %v614 = vpop.f32.mrb[0].mxu0
  %v615 = vadd.f32 %v103, %v614
  %v616 = vpop.f32.mrb[0].mxu0
  %v617 = vadd.f32 %v107, %v616
  %618 = vdwg.mxu0
  %619 = vmatprep.subr.mxu0 %v37
  %620 = vmatpush1.msra.mxu0 %v36
  %621 = vmatprep.subr.mxu0 %v185
  %622 = vmatpush1.msra.mxu0 %v182
  %623 = vmatprep.subr.mxu0 0.0
  %624 = vmatpush1.msra.mxu0 0.0
  %625 = vmatprep.subr.mxu0 0.0
  %626 = vmatpush1.msra.mxu0 0.0
  %627 = vmatprep.subr.mxu0 0.0
  %628 = vmatpush1.msra.mxu0 0.0
  %629 = vmatprep.subr.mxu0 0.0
  %630 = vmatpush1.msra.mxu0 0.0
  %631 = vmatprep.subr.mxu0 0.0
  %632 = vmatpush1.msra.mxu0 0.0
  %633 = vmatprep.subr.mxu0 0.0
  %634 = vmatpush1.msra.mxu0 0.0
  %635 = vmatprep.subr.mxu0 0.0
  %636 = vmatpush1.msra.mxu0 0.0
  %637 = vmatprep.subr.mxu0 0.0
  %638 = vmatpush1.msra.mxu0 0.0
  %639 = vmatprep.subr.mxu0 0.0
  %640 = vmatpush1.msra.mxu0 0.0
  %641 = vmatprep.subr.mxu0 0.0
  %642 = vmatpush1.msra.mxu0 0.0
  %643 = vmatprep.subr.mxu0 0.0
  %644 = vmatpush1.msra.mxu0 0.0
  %645 = vmatprep.subr.mxu0 0.0
  %646 = vmatpush1.msra.mxu0 0.0
  %647 = vmatprep.subr.mxu0 0.0
  %648 = vmatpush1.msra.mxu0 0.0
  %649 = vmatprep.subr.mxu0 0.0
  %650 = vmatpush1.msra.mxu0 0.0
  %651 = vmatprep.subr.mxu0 0.0
  %652 = vmatpush1.msra.mxu0 0.0
  %653 = vmatprep.subr.mxu0 0.0
  %654 = vmatpush1.msra.mxu0 0.0
  %655 = vmatprep.subr.mxu0 0.0
  %656 = vmatpush1.msra.mxu0 0.0
  %657 = vmatprep.subr.mxu0 0.0
  %658 = vmatpush1.msra.mxu0 0.0
  %659 = vmatprep.subr.mxu0 0.0
  %660 = vmatpush1.msra.mxu0 0.0
  %661 = vmatprep.subr.mxu0 0.0
  %662 = vmatpush1.msra.mxu0 0.0
  %663 = vmatprep.subr.mxu0 0.0
  %664 = vmatpush1.msra.mxu0 0.0
  %665 = vmatprep.subr.mxu0 0.0
  %666 = vmatpush1.msra.mxu0 0.0
  %667 = vmatprep.subr.mxu0 0.0
  %668 = vmatpush1.msra.mxu0 0.0
  %669 = vmatprep.subr.mxu0 0.0
  %670 = vmatpush1.msra.mxu0 0.0
  %671 = vmatprep.subr.mxu0 0.0
  %672 = vmatpush1.msra.mxu0 0.0
  %673 = vmatprep.subr.mxu0 0.0
  %674 = vmatpush1.msra.mxu0 0.0
  %675 = vmatprep.subr.mxu0 0.0
  %676 = vmatpush1.msra.mxu0 0.0
  %677 = vmatprep.subr.mxu0 0.0
  %678 = vmatpush1.msra.mxu0 0.0
  %679 = vmatprep.subr.mxu0 0.0
  %680 = vmatpush1.msra.mxu0 0.0
  %681 = vmatprep.subr.mxu0 0.0
  %682 = vmatpush1.msra.mxu0 0.0
  %683 = vmatprep.mubr.f32.mxu0 0.0
  %684 = vmatmul.mubr.f32.gmra.mrb[0].mxu0 %v142
  %v685 = vpop.f32.mrb[0].mxu0
  %v686 = vadd.f32 %v111, %v685
  %v687 = vpop.f32.mrb[0].mxu0
  %v688 = vadd.f32 %v115, %v687
  %689 = vdwg.mxu0
  %690 = vmatprep.subr.mxu0 %v39
  %691 = vmatpush1.msra.mxu0 %v38
  %692 = vmatprep.subr.mxu0 %v191
  %693 = vmatpush1.msra.mxu0 %v188
  %694 = vmatprep.subr.mxu0 0.0
  %695 = vmatpush1.msra.mxu0 0.0
  %696 = vmatprep.subr.mxu0 0.0
  %697 = vmatpush1.msra.mxu0 0.0
  %698 = vmatprep.subr.mxu0 0.0
  %699 = vmatpush1.msra.mxu0 0.0
  %700 = vmatprep.subr.mxu0 0.0
  %701 = vmatpush1.msra.mxu0 0.0
  %702 = vmatprep.subr.mxu0 0.0
  %703 = vmatpush1.msra.mxu0 0.0
  %704 = vmatprep.subr.mxu0 0.0
  %705 = vmatpush1.msra.mxu0 0.0
  %706 = vmatprep.subr.mxu0 0.0
  %707 = vmatpush1.msra.mxu0 0.0
  %708 = vmatprep.subr.mxu0 0.0
  %709 = vmatpush1.msra.mxu0 0.0
  %710 = vmatprep.subr.mxu0 0.0
  %711 = vmatpush1.msra.mxu0 0.0
  %712 = vmatprep.subr.mxu0 0.0
  %713 = vmatpush1.msra.mxu0 0.0
  %714 = vmatprep.subr.mxu0 0.0
  %715 = vmatpush1.msra.mxu0 0.0
  %716 = vmatprep.subr.mxu0 0.0
  %717 = vmatpush1.msra.mxu0 0.0
  %718 = vmatprep.subr.mxu0 0.0
  %719 = vmatpush1.msra.mxu0 0.0
  %720 = vmatprep.subr.mxu0 0.0
  %721 = vmatpush1.msra.mxu0 0.0
  %722 = vmatprep.subr.mxu0 0.0
  %723 = vmatpush1.msra.mxu0 0.0
  %724 = vmatprep.subr.mxu0 0.0
  %725 = vmatpush1.msra.mxu0 0.0
  %726 = vmatprep.subr.mxu0 0.0
  %727 = vmatpush1.msra.mxu0 0.0
  %728 = vmatprep.subr.mxu0 0.0
  %729 = vmatpush1.msra.mxu0 0.0
  %730 = vmatprep.subr.mxu0 0.0
  %731 = vmatpush1.msra.mxu0 0.0
  %732 = vmatprep.subr.mxu0 0.0
  %733 = vmatpush1.msra.mxu0 0.0
  %734 = vmatprep.subr.mxu0 0.0
  %735 = vmatpush1.msra.mxu0 0.0
  %736 = vmatprep.subr.mxu0 0.0
  %737 = vmatpush1.msra.mxu0 0.0
  %738 = vmatprep.subr.mxu0 0.0
  %739 = vmatpush1.msra.mxu0 0.0
  %740 = vmatprep.subr.mxu0 0.0
  %741 = vmatpush1.msra.mxu0 0.0
  %742 = vmatprep.subr.mxu0 0.0
  %743 = vmatpush1.msra.mxu0 0.0
  %744 = vmatprep.subr.mxu0 0.0
  %745 = vmatpush1.msra.mxu0 0.0
  %746 = vmatprep.subr.mxu0 0.0
  %747 = vmatpush1.msra.mxu0 0.0
  %748 = vmatprep.subr.mxu0 0.0
  %749 = vmatpush1.msra.mxu0 0.0
  %750 = vmatprep.subr.mxu0 0.0
  %751 = vmatpush1.msra.mxu0 0.0
  %752 = vmatprep.subr.mxu0 0.0
  %753 = vmatpush1.msra.mxu0 0.0
  %754 = vmatprep.mubr.f32.mxu0 0.0
  %755 = vmatmul.mubr.f32.gmra.mrb[0].mxu0 %v142
  %v756 = vpop.f32.mrb[0].mxu0
  %v757 = vadd.f32 %v119, %v756
  %v758 = vpop.f32.mrb[0].mxu0
  %v759 = vadd.f32 %v123, %v758
  %760 = vdwg.mxu0
  %761 = vst [vmem:[#allocation2] sm:$0xff] %v260
  %762 = vst [vmem:[#allocation2 + $0x8] sm:$0xff] %v262
  %763 = vst [vmem:[#allocation2 + $0x10] sm:$0xff] %v331
  %764 = vst [vmem:[#allocation2 + $0x18] sm:$0xff] %v333
  %765 = vst [vmem:[#allocation2 + $0x20] sm:$0xff] %v402
  %766 = vst [vmem:[#allocation2 + $0x28] sm:$0xff] %v404
  %767 = vst [vmem:[#allocation2 + $0x30] sm:$0xff] %v473
  %768 = vst [vmem:[#allocation2 + $0x38] sm:$0xff] %v475
  %769 = vst [vmem:[#allocation2 + $0x40] sm:$0xff] %v544
  %770 = vst [vmem:[#allocation2 + $0x48] sm:$0xff] %v546
  %771 = vst [vmem:[#allocation2 + $0x50] sm:$0xff] %v615
  %772 = vst [vmem:[#allocation2 + $0x58] sm:$0xff] %v617
  %773 = vst [vmem:[#allocation2 + $0x60] sm:$0xff] %v686
  %774 = vst [vmem:[#allocation2 + $0x68] sm:$0xff] %v688
  %775 = vst [vmem:[#allocation2 + $0x70] sm:$0xff] %v757
  %776 = vst [vmem:[#allocation2 + $0x78] sm:$0xff] %v759
  %v777 = vld [vmem:[%s1] sm:$0xff]
  %v778 = vld [vmem:[%s4] sm:$0xff]
  %v779 = vld [vmem:[%s4 + $0x20] sm:$0xff]
  %vm780 = vcmask 130048
  %v782 = vsel %vm780, %v777, 0
  %784 = vmatprep.subr.mxu0 0.0
  %785 = vmatpush1.msra.mxu0 %v778
  %786 = vmatprep.subr.mxu0 0.0
  %787 = vmatpush1.msra.mxu0 %v779
  %788 = vmatprep.subr.mxu0 0.0
  %789 = vmatpush1.msra.mxu0 0.0
  %790 = vmatprep.subr.mxu0 0.0
  %791 = vmatpush1.msra.mxu0 0.0
  %792 = vmatprep.subr.mxu0 0.0
  %793 = vmatpush1.msra.mxu0 0.0
  %794 = vmatprep.subr.mxu0 0.0
  %795 = vmatpush1.msra.mxu0 0.0
  %796 = vmatprep.subr.mxu0 0.0
  %797 = vmatpush1.msra.mxu0 0.0
  %798 = vmatprep.subr.mxu0 0.0
  %799 = vmatpush1.msra.mxu0 0.0
  %800 = vmatprep.subr.mxu0 0.0
  %801 = vmatpush1.msra.mxu0 0.0
  %802 = vmatprep.subr.mxu0 0.0
  %803 = vmatpush1.msra.mxu0 0.0
  %804 = vmatprep.subr.mxu0 0.0
  %805 = vmatpush1.msra.mxu0 0.0
  %806 = vmatprep.subr.mxu0 0.0
  %807 = vmatpush1.msra.mxu0 0.0
  %808 = vmatprep.subr.mxu0 0.0
  %809 = vmatpush1.msra.mxu0 0.0
  %810 = vmatprep.subr.mxu0 0.0
  %811 = vmatpush1.msra.mxu0 0.0
  %812 = vmatprep.subr.mxu0 0.0
  %813 = vmatpush1.msra.mxu0 0.0
  %814 = vmatprep.subr.mxu0 0.0
  %815 = vmatpush1.msra.mxu0 0.0
  %816 = vmatprep.subr.mxu0 0.0
  %817 = vmatpush1.msra.mxu0 0.0
  %818 = vmatprep.subr.mxu0 0.0
  %819 = vmatpush1.msra.mxu0 0.0
  %820 = vmatprep.subr.mxu0 0.0
  %821 = vmatpush1.msra.mxu0 0.0
  %822 = vmatprep.subr.mxu0 0.0
  %823 = vmatpush1.msra.mxu0 0.0
  %824 = vmatprep.subr.mxu0 0.0
  %825 = vmatpush1.msra.mxu0 0.0
  %826 = vmatprep.subr.mxu0 0.0
  %827 = vmatpush1.msra.mxu0 0.0
  %828 = vmatprep.subr.mxu0 0.0
  %829 = vmatpush1.msra.mxu0 0.0
  %830 = vmatprep.subr.mxu0 0.0
  %831 = vmatpush1.msra.mxu0 0.0
  %832 = vmatprep.subr.mxu0 0.0
  %833 = vmatpush1.msra.mxu0 0.0
  %834 = vmatprep.subr.mxu0 0.0
  %835 = vmatpush1.msra.mxu0 0.0
  %836 = vmatprep.subr.mxu0 0.0
  %837 = vmatpush1.msra.mxu0 0.0
  %838 = vmatprep.subr.mxu0 0.0
  %839 = vmatpush1.msra.mxu0 0.0
  %840 = vmatprep.subr.mxu0 0.0
  %841 = vmatpush1.msra.mxu0 0.0
  %842 = vmatprep.subr.mxu0 0.0
  %843 = vmatpush1.msra.mxu0 0.0
  %844 = vmatprep.subr.mxu0 0.0
  %845 = vmatpush1.msra.mxu0 0.0
  %846 = vmatprep.subr.mxu0 0.0
  %847 = vmatpush1.msra.mxu0 0.0
  %848 = vmatprep.mubr.f32.mxu0 0.0
  %849 = vmatmul.mubr.f32.gmra.mrb[0].mxu0 %v782
  %v850 = vpop.f32.mrb[0].mxu0
  %v851 = vadd.f32 0.0, %v850
  %v852 = vpop.f32.mrb[0].mxu0
  %853 = vdwg.mxu0
  %v854 = vld [vmem:[#allocation2] sm:$0xff]
  %v855 = vmul.f32 %v851, %v854
  %v856 = vadd.f32 %v855, 0.0
  %v857 = vld [vmem:[%s4 + $0x8] sm:$0xff]
  %v858 = vld [vmem:[%s4 + $0x28] sm:$0xff]
  %859 = vmatprep.subr.mxu0 0.0
  %860 = vmatpush1.msra.mxu0 %v857
  %861 = vmatprep.subr.mxu0 0.0
  %862 = vmatpush1.msra.mxu0 %v858
  %863 = vmatprep.subr.mxu0 0.0
  %864 = vmatpush1.msra.mxu0 0.0
  %865 = vmatprep.subr.mxu0 0.0
  %866 = vmatpush1.msra.mxu0 0.0
  %867 = vmatprep.subr.mxu0 0.0
  %868 = vmatpush1.msra.mxu0 0.0
  %869 = vmatprep.subr.mxu0 0.0
  %870 = vmatpush1.msra.mxu0 0.0
  %871 = vmatprep.subr.mxu0 0.0
  %872 = vmatpush1.msra.mxu0 0.0
  %873 = vmatprep.subr.mxu0 0.0
  %874 = vmatpush1.msra.mxu0 0.0
  %875 = vmatprep.subr.mxu0 0.0
  %876 = vmatpush1.msra.mxu0 0.0
  %877 = vmatprep.subr.mxu0 0.0
  %878 = vmatpush1.msra.mxu0 0.0
  %879 = vmatprep.subr.mxu0 0.0
  %880 = vmatpush1.msra.mxu0 0.0
  %881 = vmatprep.subr.mxu0 0.0
  %882 = vmatpush1.msra.mxu0 0.0
  %883 = vmatprep.subr.mxu0 0.0
  %884 = vmatpush1.msra.mxu0 0.0
  %885 = vmatprep.subr.mxu0 0.0
  %886 = vmatpush1.msra.mxu0 0.0
  %887 = vmatprep.subr.mxu0 0.0
  %888 = vmatpush1.msra.mxu0 0.0
  %889 = vmatprep.subr.mxu0 0.0
  %890 = vmatpush1.msra.mxu0 0.0
  %891 = vmatprep.subr.mxu0 0.0
  %892 = vmatpush1.msra.mxu0 0.0
  %893 = vmatprep.subr.mxu0 0.0
  %894 = vmatpush1.msra.mxu0 0.0
  %895 = vmatprep.subr.mxu0 0.0
  %896 = vmatpush1.msra.mxu0 0.0
  %897 = vmatprep.subr.mxu0 0.0
  %898 = vmatpush1.msra.mxu0 0.0
  %899 = vmatprep.subr.mxu0 0.0
  %900 = vmatpush1.msra.mxu0 0.0
  %901 = vmatprep.subr.mxu0 0.0
  %902 = vmatpush1.msra.mxu0 0.0
  %903 = vmatprep.subr.mxu0 0.0
  %904 = vmatpush1.msra.mxu0 0.0
  %905 = vmatprep.subr.mxu0 0.0
  %906 = vmatpush1.msra.mxu0 0.0
  %907 = vmatprep.subr.mxu0 0.0
  %908 = vmatpush1.msra.mxu0 0.0
  %909 = vmatprep.subr.mxu0 0.0
  %910 = vmatpush1.msra.mxu0 0.0
  %911 = vmatprep.subr.mxu0 0.0
  %912 = vmatpush1.msra.mxu0 0.0
  %913 = vmatprep.subr.mxu0 0.0
  %914 = vmatpush1.msra.mxu0 0.0
  %915 = vmatprep.subr.mxu0 0.0
  %916 = vmatpush1.msra.mxu0 0.0
  %917 = vmatprep.subr.mxu0 0.0
  %918 = vmatpush1.msra.mxu0 0.0
  %919 = vmatprep.subr.mxu0 0.0
  %920 = vmatpush1.msra.mxu0 0.0
  %921 = vmatprep.subr.mxu0 0.0
  %922 = vmatpush1.msra.mxu0 0.0
  %923 = vmatprep.mubr.f32.mxu0 0.0
  %924 = vmatmul.mubr.f32.gmra.mrb[0].mxu0 %v782
  %v925 = vpop.f32.mrb[0].mxu0
  %v926 = vadd.f32 0.0, %v925
  %v927 = vpop.f32.mrb[0].mxu0
  %928 = vdwg.mxu0
  %v929 = vld [vmem:[#allocation2 + $0x8] sm:$0xff]
  %v930 = vmul.f32 %v926, %v929
  %v931 = vadd.f32 %v856, %v930
  %v932 = vld [vmem:[%s4 + $0x10] sm:$0xff]
  %v933 = vld [vmem:[%s4 + $0x30] sm:$0xff]
  %934 = vmatprep.subr.mxu0 0.0
  %935 = vmatpush1.msra.mxu0 %v932
  %936 = vmatprep.subr.mxu0 0.0
  %937 = vmatpush1.msra.mxu0 %v933
  %938 = vmatprep.subr.mxu0 0.0
  %939 = vmatpush1.msra.mxu0 0.0
  %940 = vmatprep.subr.mxu0 0.0
  %941 = vmatpush1.msra.mxu0 0.0
  %942 = vmatprep.subr.mxu0 0.0
  %943 = vmatpush1.msra.mxu0 0.0
  %944 = vmatprep.subr.mxu0 0.0
  %945 = vmatpush1.msra.mxu0 0.0
  %946 = vmatprep.subr.mxu0 0.0
  %947 = vmatpush1.msra.mxu0 0.0
  %948 = vmatprep.subr.mxu0 0.0
  %949 = vmatpush1.msra.mxu0 0.0
  %950 = vmatprep.subr.mxu0 0.0
  %951 = vmatpush1.msra.mxu0 0.0
  %952 = vmatprep.subr.mxu0 0.0
  %953 = vmatpush1.msra.mxu0 0.0
  %954 = vmatprep.subr.mxu0 0.0
  %955 = vmatpush1.msra.mxu0 0.0
  %956 = vmatprep.subr.mxu0 0.0
  %957 = vmatpush1.msra.mxu0 0.0
  %958 = vmatprep.subr.mxu0 0.0
  %959 = vmatpush1.msra.mxu0 0.0
  %960 = vmatprep.subr.mxu0 0.0
  %961 = vmatpush1.msra.mxu0 0.0
  %962 = vmatprep.subr.mxu0 0.0
  %963 = vmatpush1.msra.mxu0 0.0
  %964 = vmatprep.subr.mxu0 0.0
  %965 = vmatpush1.msra.mxu0 0.0
  %966 = vmatprep.subr.mxu0 0.0
  %967 = vmatpush1.msra.mxu0 0.0
  %968 = vmatprep.subr.mxu0 0.0
  %969 = vmatpush1.msra.mxu0 0.0
  %970 = vmatprep.subr.mxu0 0.0
  %971 = vmatpush1.msra.mxu0 0.0
  %972 = vmatprep.subr.mxu0 0.0
  %973 = vmatpush1.msra.mxu0 0.0
  %974 = vmatprep.subr.mxu0 0.0
  %975 = vmatpush1.msra.mxu0 0.0
  %976 = vmatprep.subr.mxu0 0.0
  %977 = vmatpush1.msra.mxu0 0.0
  %978 = vmatprep.subr.mxu0 0.0
  %979 = vmatpush1.msra.mxu0 0.0
  %980 = vmatprep.subr.mxu0 0.0
  %981 = vmatpush1.msra.mxu0 0.0
  %982 = vmatprep.subr.mxu0 0.0
  %983 = vmatpush1.msra.mxu0 0.0
  %984 = vmatprep.subr.mxu0 0.0
  %985 = vmatpush1.msra.mxu0 0.0
  %986 = vmatprep.subr.mxu0 0.0
  %987 = vmatpush1.msra.mxu0 0.0
  %988 = vmatprep.subr.mxu0 0.0
  %989 = vmatpush1.msra.mxu0 0.0
  %990 = vmatprep.subr.mxu0 0.0
  %991 = vmatpush1.msra.mxu0 0.0
  %992 = vmatprep.subr.mxu0 0.0
  %993 = vmatpush1.msra.mxu0 0.0
  %994 = vmatprep.subr.mxu0 0.0
  %995 = vmatpush1.msra.mxu0 0.0
  %996 = vmatprep.subr.mxu0 0.0
  %997 = vmatpush1.msra.mxu0 0.0
  %998 = vmatprep.mubr.f32.mxu0 0.0
  %999 = vmatmul.mubr.f32.gmra.mrb[0].mxu0 %v782
  %v1000 = vpop.f32.mrb[0].mxu0
  %v1001 = vadd.f32 0.0, %v1000
  %v1002 = vpop.f32.mrb[0].mxu0
  %1003 = vdwg.mxu0
  %v1004 = vld [vmem:[#allocation2 + $0x10] sm:$0xff]
  %v1005 = vmul.f32 %v1001, %v1004
  %v1006 = vadd.f32 %v931, %v1005
  %v1007 = vld [vmem:[%s4 + $0x18] sm:$0xff]
  %v1008 = vld [vmem:[%s4 + $0x38] sm:$0xff]
  %1009 = vmatprep.subr.mxu0 0.0
  %1010 = vmatpush1.msra.mxu0 %v1007
  %1011 = vmatprep.subr.mxu0 0.0
  %1012 = vmatpush1.msra.mxu0 %v1008
  %1013 = vmatprep.subr.mxu0 0.0
  %1014 = vmatpush1.msra.mxu0 0.0
  %1015 = vmatprep.subr.mxu0 0.0
  %1016 = vmatpush1.msra.mxu0 0.0
  %1017 = vmatprep.subr.mxu0 0.0
  %1018 = vmatpush1.msra.mxu0 0.0
  %1019 = vmatprep.subr.mxu0 0.0
  %1020 = vmatpush1.msra.mxu0 0.0
  %1021 = vmatprep.subr.mxu0 0.0
  %1022 = vmatpush1.msra.mxu0 0.0
  %1023 = vmatprep.subr.mxu0 0.0
  %1024 = vmatpush1.msra.mxu0 0.0
  %1025 = vmatprep.subr.mxu0 0.0
  %1026 = vmatpush1.msra.mxu0 0.0
  %1027 = vmatprep.subr.mxu0 0.0
  %1028 = vmatpush1.msra.mxu0 0.0
  %1029 = vmatprep.subr.mxu0 0.0
  %1030 = vmatpush1.msra.mxu0 0.0
  %1031 = vmatprep.subr.mxu0 0.0
  %1032 = vmatpush1.msra.mxu0 0.0
  %1033 = vmatprep.subr.mxu0 0.0
  %1034 = vmatpush1.msra.mxu0 0.0
  %1035 = vmatprep.subr.mxu0 0.0
  %1036 = vmatpush1.msra.mxu0 0.0
  %1037 = vmatprep.subr.mxu0 0.0
  %1038 = vmatpush1.msra.mxu0 0.0
  %1039 = vmatprep.subr.mxu0 0.0
  %1040 = vmatpush1.msra.mxu0 0.0
  %1041 = vmatprep.subr.mxu0 0.0
  %1042 = vmatpush1.msra.mxu0 0.0
  %1043 = vmatprep.subr.mxu0 0.0
  %1044 = vmatpush1.msra.mxu0 0.0
  %1045 = vmatprep.subr.mxu0 0.0
  %1046 = vmatpush1.msra.mxu0 0.0
  %1047 = vmatprep.subr.mxu0 0.0
  %1048 = vmatpush1.msra.mxu0 0.0
  %1049 = vmatprep.subr.mxu0 0.0
  %1050 = vmatpush1.msra.mxu0 0.0
  %1051 = vmatprep.subr.mxu0 0.0
  %1052 = vmatpush1.msra.mxu0 0.0
  %1053 = vmatprep.subr.mxu0 0.0
  %1054 = vmatpush1.msra.mxu0 0.0
  %1055 = vmatprep.subr.mxu0 0.0
  %1056 = vmatpush1.msra.mxu0 0.0
  %1057 = vmatprep.subr.mxu0 0.0
  %1058 = vmatpush1.msra.mxu0 0.0
  %1059 = vmatprep.subr.mxu0 0.0
  %1060 = vmatpush1.msra.mxu0 0.0
  %1061 = vmatprep.subr.mxu0 0.0
  %1062 = vmatpush1.msra.mxu0 0.0
  %1063 = vmatprep.subr.mxu0 0.0
  %1064 = vmatpush1.msra.mxu0 0.0
  %1065 = vmatprep.subr.mxu0 0.0
  %1066 = vmatpush1.msra.mxu0 0.0
  %1067 = vmatprep.subr.mxu0 0.0
  %1068 = vmatpush1.msra.mxu0 0.0
  %1069 = vmatprep.subr.mxu0 0.0
  %1070 = vmatpush1.msra.mxu0 0.0
  %1071 = vmatprep.subr.mxu0 0.0
  %1072 = vmatpush1.msra.mxu0 0.0
  %1073 = vmatprep.mubr.f32.mxu0 0.0
  %1074 = vmatmul.mubr.f32.gmra.mrb[0].mxu0 %v782
  %v1075 = vpop.f32.mrb[0].mxu0
  %v1076 = vadd.f32 0.0, %v1075
  %v1077 = vpop.f32.mrb[0].mxu0
  %1078 = vdwg.mxu0
  %v1079 = vld [vmem:[#allocation2 + $0x18] sm:$0xff]
  %v1080 = vmul.f32 %v1076, %v1079
  %v1081 = vadd.f32 %v1006, %v1080
  %v1082 = vld [vmem:[#allocation2 + $0x20] sm:$0xff]
  %v1083 = vadd.f32 %v1082, %v1081
  %1085 = vrot.lane.b32.xlu0 %v1081, 96
  %v1086 = vpop.permute.xlu0 %1085
  %v1088 = vadd.f32 %v1083, %v1086
  %1089 = vrot.lane.b32.xlu0 %v1081, 64
  %v1090 = vpop.permute.xlu0 %1089
  %v1092 = vadd.f32 %v1088, %v1090
  %1093 = vrot.lane.b32.xlu0 %v1081, 32
  %v1094 = vpop.permute.xlu0 %1093
  %v1096 = vadd.f32 %v1092, %v1094
  %v1097 = vmax.f32 %v1096, 0.0
  %v1098 = vld [vmem:[%s5] sm:$0xff]
  %v1099 = vld [vmem:[%s5 + $0x40] sm:$0xff]
  %v1100 = vld [vmem:[%s5 + $0x80] sm:$0xff]
  %v1101 = vld [vmem:[%s5 + $0xc0] sm:$0xff]
  %vm1102 = vcmask 261120
  %v1104 = vsel %vm1102, %v1097, 0
  %1106 = vmatprep.subr.mxu0 0.0
  %1107 = vmatpush1.msra.mxu0 %v1098
  %1108 = vmatprep.subr.mxu0 0.0
  %1109 = vmatpush1.msra.mxu0 %v1099
  %1110 = vmatprep.subr.mxu0 0.0
  %1111 = vmatpush1.msra.mxu0 %v1100
  %1112 = vmatprep.subr.mxu0 0.0
  %1113 = vmatpush1.msra.mxu0 %v1101
  %1114 = vmatprep.subr.mxu0 0.0
  %1115 = vmatpush1.msra.mxu0 0.0
  %1116 = vmatprep.subr.mxu0 0.0
  %1117 = vmatpush1.msra.mxu0 0.0
  %1118 = vmatprep.subr.mxu0 0.0
  %1119 = vmatpush1.msra.mxu0 0.0
  %1120 = vmatprep.subr.mxu0 0.0
  %1121 = vmatpush1.msra.mxu0 0.0
  %1122 = vmatprep.subr.mxu0 0.0
  %1123 = vmatpush1.msra.mxu0 0.0
  %1124 = vmatprep.subr.mxu0 0.0
  %1125 = vmatpush1.msra.mxu0 0.0
  %1126 = vmatprep.subr.mxu0 0.0
  %1127 = vmatpush1.msra.mxu0 0.0
  %1128 = vmatprep.subr.mxu0 0.0
  %1129 = vmatpush1.msra.mxu0 0.0
  %1130 = vmatprep.subr.mxu0 0.0
  %1131 = vmatpush1.msra.mxu0 0.0
  %1132 = vmatprep.subr.mxu0 0.0
  %1133 = vmatpush1.msra.mxu0 0.0
  %1134 = vmatprep.subr.mxu0 0.0
  %1135 = vmatpush1.msra.mxu0 0.0
  %1136 = vmatprep.subr.mxu0 0.0
  %1137 = vmatpush1.msra.mxu0 0.0
  %1138 = vmatprep.subr.mxu0 0.0
  %1139 = vmatpush1.msra.mxu0 0.0
  %1140 = vmatprep.subr.mxu0 0.0
  %1141 = vmatpush1.msra.mxu0 0.0
  %1142 = vmatprep.subr.mxu0 0.0
  %1143 = vmatpush1.msra.mxu0 0.0
  %1144 = vmatprep.subr.mxu0 0.0
  %1145 = vmatpush1.msra.mxu0 0.0
  %1146 = vmatprep.subr.mxu0 0.0
  %1147 = vmatpush1.msra.mxu0 0.0
  %1148 = vmatprep.subr.mxu0 0.0
  %1149 = vmatpush1.msra.mxu0 0.0
  %1150 = vmatprep.subr.mxu0 0.0
  %1151 = vmatpush1.msra.mxu0 0.0
  %1152 = vmatprep.subr.mxu0 0.0
  %1153 = vmatpush1.msra.mxu0 0.0
  %1154 = vmatprep.subr.mxu0 0.0
  %1155 = vmatpush1.msra.mxu0 0.0
  %1156 = vmatprep.subr.mxu0 0.0
  %1157 = vmatpush1.msra.mxu0 0.0
  %1158 = vmatprep.subr.mxu0 0.0
  %1159 = vmatpush1.msra.mxu0 0.0
  %1160 = vmatprep.subr.mxu0 0.0
  %1161 = vmatpush1.msra.mxu0 0.0
  %1162 = vmatprep.subr.mxu0 0.0
  %1163 = vmatpush1.msra.mxu0 0.0
  %1164 = vmatprep.subr.mxu0 0.0
  %1165 = vmatpush1.msra.mxu0 0.0
  %1166 = vmatprep.subr.mxu0 0.0
  %1167 = vmatpush1.msra.mxu0 0.0
  %1168 = vmatprep.subr.mxu0 0.0
  %1169 = vmatpush1.msra.mxu0 0.0
  %1170 = vmatprep.mubr.f32.mxu0 0.0
  %1171 = vmatmul.mubr.f32.gmra.mrb[0].mxu0 %v1104
  %v1172 = vpop.f32.mrb[0].mxu0
  %v1173 = vadd.f32 0.0, %v1172
  %v1174 = vpop.f32.mrb[0].mxu0
  %1175 = vdwg.mxu0
  %v1176 = vld [vmem:[#allocation2 + $0x28] sm:$0xff]
  %v1177 = vmul.f32 %v1173, %v1176
  %v1178 = vadd.f32 %v1177, 0.0
  %v1179 = vld [vmem:[%s5 + $0x8] sm:$0xff]
  %v1180 = vld [vmem:[%s5 + $0x48] sm:$0xff]
  %v1181 = vld [vmem:[%s5 + $0x88] sm:$0xff]
  %v1182 = vld [vmem:[%s5 + $0xc8] sm:$0xff]
  %1183 = vmatprep.subr.mxu0 0.0
  %1184 = vmatpush1.msra.mxu0 %v1179
  %1185 = vmatprep.subr.mxu0 0.0
  %1186 = vmatpush1.msra.mxu0 %v1180
  %1187 = vmatprep.subr.mxu0 0.0
  %1188 = vmatpush1.msra.mxu0 %v1181
  %1189 = vmatprep.subr.mxu0 0.0
  %1190 = vmatpush1.msra.mxu0 %v1182
  %1191 = vmatprep.subr.mxu0 0.0
  %1192 = vmatpush1.msra.mxu0 0.0
  %1193 = vmatprep.subr.mxu0 0.0
  %1194 = vmatpush1.msra.mxu0 0.0
  %1195 = vmatprep.subr.mxu0 0.0
  %1196 = vmatpush1.msra.mxu0 0.0
  %1197 = vmatprep.subr.mxu0 0.0
  %1198 = vmatpush1.msra.mxu0 0.0
  %1199 = vmatprep.subr.mxu0 0.0
  %1200 = vmatpush1.msra.mxu0 0.0
  %1201 = vmatprep.subr.mxu0 0.0
  %1202 = vmatpush1.msra.mxu0 0.0
  %1203 = vmatprep.subr.mxu0 0.0
  %1204 = vmatpush1.msra.mxu0 0.0
  %1205 = vmatprep.subr.mxu0 0.0
  %1206 = vmatpush1.msra.mxu0 0.0
  %1207 = vmatprep.subr.mxu0 0.0
  %1208 = vmatpush1.msra.mxu0 0.0
  %1209 = vmatprep.subr.mxu0 0.0
  %1210 = vmatpush1.msra.mxu0 0.0
  %1211 = vmatprep.subr.mxu0 0.0
  %1212 = vmatpush1.msra.mxu0 0.0
  %1213 = vmatprep.subr.mxu0 0.0
  %1214 = vmatpush1.msra.mxu0 0.0
  %1215 = vmatprep.subr.mxu0 0.0
  %1216 = vmatpush1.msra.mxu0 0.0
  %1217 = vmatprep.subr.mxu0 0.0
  %1218 = vmatpush1.msra.mxu0 0.0
  %1219 = vmatprep.subr.mxu0 0.0
  %1220 = vmatpush1.msra.mxu0 0.0
  %1221 = vmatprep.subr.mxu0 0.0
  %1222 = vmatpush1.msra.mxu0 0.0
  %1223 = vmatprep.subr.mxu0 0.0
  %1224 = vmatpush1.msra.mxu0 0.0
  %1225 = vmatprep.subr.mxu0 0.0
  %1226 = vmatpush1.msra.mxu0 0.0
  %1227 = vmatprep.subr.mxu0 0.0
  %1228 = vmatpush1.msra.mxu0 0.0
  %1229 = vmatprep.subr.mxu0 0.0
  %1230 = vmatpush1.msra.mxu0 0.0
  %1231 = vmatprep.subr.mxu0 0.0
  %1232 = vmatpush1.msra.mxu0 0.0
  %1233 = vmatprep.subr.mxu0 0.0
  %1234 = vmatpush1.msra.mxu0 0.0
  %1235 = vmatprep.subr.mxu0 0.0
  %1236 = vmatpush1.msra.mxu0 0.0
  %1237 = vmatprep.subr.mxu0 0.0
  %1238 = vmatpush1.msra.mxu0 0.0
  %1239 = vmatprep.subr.mxu0 0.0
  %1240 = vmatpush1.msra.mxu0 0.0
  %1241 = vmatprep.subr.mxu0 0.0
  %1242 = vmatpush1.msra.mxu0 0.0
  %1243 = vmatprep.subr.mxu0 0.0
  %1244 = vmatpush1.msra.mxu0 0.0
  %1245 = vmatprep.subr.mxu0 0.0
  %1246 = vmatpush1.msra.mxu0 0.0
  %1247 = vmatprep.mubr.f32.mxu0 0.0
  %1248 = vmatmul.mubr.f32.gmra.mrb[0].mxu0 %v1104
  %v1249 = vpop.f32.mrb[0].mxu0
  %v1250 = vadd.f32 0.0, %v1249
  %v1251 = vpop.f32.mrb[0].mxu0
  %1252 = vdwg.mxu0
  %v1253 = vld [vmem:[#allocation2 + $0x30] sm:$0xff]
  %v1254 = vmul.f32 %v1250, %v1253
  %v1255 = vadd.f32 %v1178, %v1254
  %v1256 = vld [vmem:[%s5 + $0x10] sm:$0xff]
  %v1257 = vld [vmem:[%s5 + $0x50] sm:$0xff]
  %v1258 = vld [vmem:[%s5 + $0x90] sm:$0xff]
  %v1259 = vld [vmem:[%s5 + $0xd0] sm:$0xff]
  %1260 = vmatprep.subr.mxu0 0.0
  %1261 = vmatpush1.msra.mxu0 %v1256
  %1262 = vmatprep.subr.mxu0 0.0
  %1263 = vmatpush1.msra.mxu0 %v1257
  %1264 = vmatprep.subr.mxu0 0.0
  %1265 = vmatpush1.msra.mxu0 %v1258
  %1266 = vmatprep.subr.mxu0 0.0
  %1267 = vmatpush1.msra.mxu0 %v1259
  %1268 = vmatprep.subr.mxu0 0.0
  %1269 = vmatpush1.msra.mxu0 0.0
  %1270 = vmatprep.subr.mxu0 0.0
  %1271 = vmatpush1.msra.mxu0 0.0
  %1272 = vmatprep.subr.mxu0 0.0
  %1273 = vmatpush1.msra.mxu0 0.0
  %1274 = vmatprep.subr.mxu0 0.0
  %1275 = vmatpush1.msra.mxu0 0.0
  %1276 = vmatprep.subr.mxu0 0.0
  %1277 = vmatpush1.msra.mxu0 0.0
  %1278 = vmatprep.subr.mxu0 0.0
  %1279 = vmatpush1.msra.mxu0 0.0
  %1280 = vmatprep.subr.mxu0 0.0
  %1281 = vmatpush1.msra.mxu0 0.0
  %1282 = vmatprep.subr.mxu0 0.0
  %1283 = vmatpush1.msra.mxu0 0.0
  %1284 = vmatprep.subr.mxu0 0.0
  %1285 = vmatpush1.msra.mxu0 0.0
  %1286 = vmatprep.subr.mxu0 0.0
  %1287 = vmatpush1.msra.mxu0 0.0
  %1288 = vmatprep.subr.mxu0 0.0
  %1289 = vmatpush1.msra.mxu0 0.0
  %1290 = vmatprep.subr.mxu0 0.0
  %1291 = vmatpush1.msra.mxu0 0.0
  %1292 = vmatprep.subr.mxu0 0.0
  %1293 = vmatpush1.msra.mxu0 0.0
  %1294 = vmatprep.subr.mxu0 0.0
  %1295 = vmatpush1.msra.mxu0 0.0
  %1296 = vmatprep.subr.mxu0 0.0
  %1297 = vmatpush1.msra.mxu0 0.0
  %1298 = vmatprep.subr.mxu0 0.0
  %1299 = vmatpush1.msra.mxu0 0.0
  %1300 = vmatprep.subr.mxu0 0.0
  %1301 = vmatpush1.msra.mxu0 0.0
  %1302 = vmatprep.subr.mxu0 0.0
  %1303 = vmatpush1.msra.mxu0 0.0
  %1304 = vmatprep.subr.mxu0 0.0
  %1305 = vmatpush1.msra.mxu0 0.0
  %1306 = vmatprep.subr.mxu0 0.0
  %1307 = vmatpush1.msra.mxu0 0.0
  %1308 = vmatprep.subr.mxu0 0.0
  %1309 = vmatpush1.msra.mxu0 0.0
  %1310 = vmatprep.subr.mxu0 0.0
  %1311 = vmatpush1.msra.mxu0 0.0
  %1312 = vmatprep.subr.mxu0 0.0
  %1313 = vmatpush1.msra.mxu0 0.0
  %1314 = vmatprep.subr.mxu0 0.0
  %1315 = vmatpush1.msra.mxu0 0.0
  %1316 = vmatprep.subr.mxu0 0.0
  %1317 = vmatpush1.msra.mxu0 0.0
  %1318 = vmatprep.subr.mxu0 0.0
  %1319 = vmatpush1.msra.mxu0 0.0
  %1320 = vmatprep.subr.mxu0 0.0
  %1321 = vmatpush1.msra.mxu0 0.0
  %1322 = vmatprep.subr.mxu0 0.0
  %1323 = vmatpush1.msra.mxu0 0.0
  %1324 = vmatprep.mubr.f32.mxu0 0.0
  %1325 = vmatmul.mubr.f32.gmra.mrb[0].mxu0 %v1104
  %v1326 = vpop.f32.mrb[0].mxu0
  %v1327 = vadd.f32 0.0, %v1326
  %v1328 = vpop.f32.mrb[0].mxu0
  %1329 = vdwg.mxu0
  %v1330 = vld [vmem:[#allocation2 + $0x38] sm:$0xff]
  %v1331 = vmul.f32 %v1327, %v1330
  %v1332 = vadd.f32 %v1255, %v1331
  %v1333 = vld [vmem:[%s5 + $0x18] sm:$0xff]
  %v1334 = vld [vmem:[%s5 + $0x58] sm:$0xff]
  %v1335 = vld [vmem:[%s5 + $0x98] sm:$0xff]
  %v1336 = vld [vmem:[%s5 + $0xd8] sm:$0xff]
  %1337 = vmatprep.subr.mxu0 0.0
  %1338 = vmatpush1.msra.mxu0 %v1333
  %1339 = vmatprep.subr.mxu0 0.0
  %1340 = vmatpush1.msra.mxu0 %v1334
  %1341 = vmatprep.subr.mxu0 0.0
  %1342 = vmatpush1.msra.mxu0 %v1335
  %1343 = vmatprep.subr.mxu0 0.0
  %1344 = vmatpush1.msra.mxu0 %v1336
  %1345 = vmatprep.subr.mxu0 0.0
  %1346 = vmatpush1.msra.mxu0 0.0
  %1347 = vmatprep.subr.mxu0 0.0
  %1348 = vmatpush1.msra.mxu0 0.0
  %1349 = vmatprep.subr.mxu0 0.0
  %1350 = vmatpush1.msra.mxu0 0.0
  %1351 = vmatprep.subr.mxu0 0.0
  %1352 = vmatpush1.msra.mxu0 0.0
  %1353 = vmatprep.subr.mxu0 0.0
  %1354 = vmatpush1.msra.mxu0 0.0
  %1355 = vmatprep.subr.mxu0 0.0
  %1356 = vmatpush1.msra.mxu0 0.0
  %1357 = vmatprep.subr.mxu0 0.0
  %1358 = vmatpush1.msra.mxu0 0.0
  %1359 = vmatprep.subr.mxu0 0.0
  %1360 = vmatpush1.msra.mxu0 0.0
  %1361 = vmatprep.subr.mxu0 0.0
  %1362 = vmatpush1.msra.mxu0 0.0
  %1363 = vmatprep.subr.mxu0 0.0
  %1364 = vmatpush1.msra.mxu0 0.0
  %1365 = vmatprep.subr.mxu0 0.0
  %1366 = vmatpush1.msra.mxu0 0.0
  %1367 = vmatprep.subr.mxu0 0.0
  %1368 = vmatpush1.msra.mxu0 0.0
  %1369 = vmatprep.subr.mxu0 0.0
  %1370 = vmatpush1.msra.mxu0 0.0
  %1371 = vmatprep.subr.mxu0 0.0
  %1372 = vmatpush1.msra.mxu0 0.0
  %1373 = vmatprep.subr.mxu0 0.0
  %1374 = vmatpush1.msra.mxu0 0.0
  %1375 = vmatprep.subr.mxu0 0.0
  %1376 = vmatpush1.msra.mxu0 0.0
  %1377 = vmatprep.subr.mxu0 0.0
  %1378 = vmatpush1.msra.mxu0 0.0
  %1379 = vmatprep.subr.mxu0 0.0
  %1380 = vmatpush1.msra.mxu0 0.0
  %1381 = vmatprep.subr.mxu0 0.0
  %1382 = vmatpush1.msra.mxu0 0.0
  %1383 = vmatprep.subr.mxu0 0.0
  %1384 = vmatpush1.msra.mxu0 0.0
  %1385 = vmatprep.subr.mxu0 0.0
  %1386 = vmatpush1.msra.mxu0 0.0
  %1387 = vmatprep.subr.mxu0 0.0
  %1388 = vmatpush1.msra.mxu0 0.0
  %1389 = vmatprep.subr.mxu0 0.0
  %1390 = vmatpush1.msra.mxu0 0.0
  %1391 = vmatprep.subr.mxu0 0.0
  %1392 = vmatpush1.msra.mxu0 0.0
  %1393 = vmatprep.subr.mxu0 0.0
  %1394 = vmatpush1.msra.mxu0 0.0
  %1395 = vmatprep.subr.mxu0 0.0
  %1396 = vmatpush1.msra.mxu0 0.0
  %1397 = vmatprep.subr.mxu0 0.0
  %1398 = vmatpush1.msra.mxu0 0.0
  %1399 = vmatprep.subr.mxu0 0.0
  %1400 = vmatpush1.msra.mxu0 0.0
  %1401 = vmatprep.mubr.f32.mxu0 0.0
  %1402 = vmatmul.mubr.f32.gmra.mrb[0].mxu0 %v1104
  %v1403 = vpop.f32.mrb[0].mxu0
  %v1404 = vadd.f32 0.0, %v1403
  %v1405 = vpop.f32.mrb[0].mxu0
  %1406 = vdwg.mxu0
  %v1407 = vld [vmem:[#allocation2 + $0x40] sm:$0xff]
  %v1408 = vmul.f32 %v1404, %v1407
  %v1409 = vadd.f32 %v1332, %v1408
  %v1410 = vld [vmem:[%s5 + $0x20] sm:$0xff]
  %v1411 = vld [vmem:[%s5 + $0x60] sm:$0xff]
  %v1412 = vld [vmem:[%s5 + $0xa0] sm:$0xff]
  %v1413 = vld [vmem:[%s5 + $0xe0] sm:$0xff]
  %1414 = vmatprep.subr.mxu0 0.0
  %1415 = vmatpush1.msra.mxu0 %v1410
  %1416 = vmatprep.subr.mxu0 0.0
  %1417 = vmatpush1.msra.mxu0 %v1411
  %1418 = vmatprep.subr.mxu0 0.0
  %1419 = vmatpush1.msra.mxu0 %v1412
  %1420 = vmatprep.subr.mxu0 0.0
  %1421 = vmatpush1.msra.mxu0 %v1413
  %1422 = vmatprep.subr.mxu0 0.0
  %1423 = vmatpush1.msra.mxu0 0.0
  %1424 = vmatprep.subr.mxu0 0.0
  %1425 = vmatpush1.msra.mxu0 0.0
  %1426 = vmatprep.subr.mxu0 0.0
  %1427 = vmatpush1.msra.mxu0 0.0
  %1428 = vmatprep.subr.mxu0 0.0
  %1429 = vmatpush1.msra.mxu0 0.0
  %1430 = vmatprep.subr.mxu0 0.0
  %1431 = vmatpush1.msra.mxu0 0.0
  %1432 = vmatprep.subr.mxu0 0.0
  %1433 = vmatpush1.msra.mxu0 0.0
  %1434 = vmatprep.subr.mxu0 0.0
  %1435 = vmatpush1.msra.mxu0 0.0
  %1436 = vmatprep.subr.mxu0 0.0
  %1437 = vmatpush1.msra.mxu0 0.0
  %1438 = vmatprep.subr.mxu0 0.0
  %1439 = vmatpush1.msra.mxu0 0.0
  %1440 = vmatprep.subr.mxu0 0.0
  %1441 = vmatpush1.msra.mxu0 0.0
  %1442 = vmatprep.subr.mxu0 0.0
  %1443 = vmatpush1.msra.mxu0 0.0
  %1444 = vmatprep.subr.mxu0 0.0
  %1445 = vmatpush1.msra.mxu0 0.0
  %1446 = vmatprep.subr.mxu0 0.0
  %1447 = vmatpush1.msra.mxu0 0.0
  %1448 = vmatprep.subr.mxu0 0.0
  %1449 = vmatpush1.msra.mxu0 0.0
  %1450 = vmatprep.subr.mxu0 0.0
  %1451 = vmatpush1.msra.mxu0 0.0
  %1452 = vmatprep.subr.mxu0 0.0
  %1453 = vmatpush1.msra.mxu0 0.0
  %1454 = vmatprep.subr.mxu0 0.0
  %1455 = vmatpush1.msra.mxu0 0.0
  %1456 = vmatprep.subr.mxu0 0.0
  %1457 = vmatpush1.msra.mxu0 0.0
  %1458 = vmatprep.subr.mxu0 0.0
  %1459 = vmatpush1.msra.mxu0 0.0
  %1460 = vmatprep.subr.mxu0 0.0
  %1461 = vmatpush1.msra.mxu0 0.0
  %1462 = vmatprep.subr.mxu0 0.0
  %1463 = vmatpush1.msra.mxu0 0.0
  %1464 = vmatprep.subr.mxu0 0.0
  %1465 = vmatpush1.msra.mxu0 0.0
  %1466 = vmatprep.subr.mxu0 0.0
  %1467 = vmatpush1.msra.mxu0 0.0
  %1468 = vmatprep.subr.mxu0 0.0
  %1469 = vmatpush1.msra.mxu0 0.0
  %1470 = vmatprep.subr.mxu0 0.0
  %1471 = vmatpush1.msra.mxu0 0.0
  %1472 = vmatprep.subr.mxu0 0.0
  %1473 = vmatpush1.msra.mxu0 0.0
  %1474 = vmatprep.subr.mxu0 0.0
  %1475 = vmatpush1.msra.mxu0 0.0
  %1476 = vmatprep.subr.mxu0 0.0
  %1477 = vmatpush1.msra.mxu0 0.0
  %1478 = vmatprep.mubr.f32.mxu0 0.0
  %1479 = vmatmul.mubr.f32.gmra.mrb[0].mxu0 %v1104
  %v1480 = vpop.f32.mrb[0].mxu0
  %v1481 = vadd.f32 0.0, %v1480
  %v1482 = vpop.f32.mrb[0].mxu0
  %1483 = vdwg.mxu0
  %v1484 = vld [vmem:[#allocation2 + $0x48] sm:$0xff]
  %v1485 = vmul.f32 %v1481, %v1484
  %v1486 = vadd.f32 %v1409, %v1485
  %v1487 = vld [vmem:[%s5 + $0x28] sm:$0xff]
  %v1488 = vld [vmem:[%s5 + $0x68] sm:$0xff]
  %v1489 = vld [vmem:[%s5 + $0xa8] sm:$0xff]
  %v1490 = vld [vmem:[%s5 + $0xe8] sm:$0xff]
  %1491 = vmatprep.subr.mxu0 0.0
  %1492 = vmatpush1.msra.mxu0 %v1487
  %1493 = vmatprep.subr.mxu0 0.0
  %1494 = vmatpush1.msra.mxu0 %v1488
  %1495 = vmatprep.subr.mxu0 0.0
  %1496 = vmatpush1.msra.mxu0 %v1489
  %1497 = vmatprep.subr.mxu0 0.0
  %1498 = vmatpush1.msra.mxu0 %v1490
  %1499 = vmatprep.subr.mxu0 0.0
  %1500 = vmatpush1.msra.mxu0 0.0
  %1501 = vmatprep.subr.mxu0 0.0
  %1502 = vmatpush1.msra.mxu0 0.0
  %1503 = vmatprep.subr.mxu0 0.0
  %1504 = vmatpush1.msra.mxu0 0.0
  %1505 = vmatprep.subr.mxu0 0.0
  %1506 = vmatpush1.msra.mxu0 0.0
  %1507 = vmatprep.subr.mxu0 0.0
  %1508 = vmatpush1.msra.mxu0 0.0
  %1509 = vmatprep.subr.mxu0 0.0
  %1510 = vmatpush1.msra.mxu0 0.0
  %1511 = vmatprep.subr.mxu0 0.0
  %1512 = vmatpush1.msra.mxu0 0.0
  %1513 = vmatprep.subr.mxu0 0.0
  %1514 = vmatpush1.msra.mxu0 0.0
  %1515 = vmatprep.subr.mxu0 0.0
  %1516 = vmatpush1.msra.mxu0 0.0
  %1517 = vmatprep.subr.mxu0 0.0
  %1518 = vmatpush1.msra.mxu0 0.0
  %1519 = vmatprep.subr.mxu0 0.0
  %1520 = vmatpush1.msra.mxu0 0.0
  %1521 = vmatprep.subr.mxu0 0.0
  %1522 = vmatpush1.msra.mxu0 0.0
  %1523 = vmatprep.subr.mxu0 0.0
  %1524 = vmatpush1.msra.mxu0 0.0
  %1525 = vmatprep.subr.mxu0 0.0
  %1526 = vmatpush1.msra.mxu0 0.0
  %1527 = vmatprep.subr.mxu0 0.0
  %1528 = vmatpush1.msra.mxu0 0.0
  %1529 = vmatprep.subr.mxu0 0.0
  %1530 = vmatpush1.msra.mxu0 0.0
  %1531 = vmatprep.subr.mxu0 0.0
  %1532 = vmatpush1.msra.mxu0 0.0
  %1533 = vmatprep.subr.mxu0 0.0
  %1534 = vmatpush1.msra.mxu0 0.0
  %1535 = vmatprep.subr.mxu0 0.0
  %1536 = vmatpush1.msra.mxu0 0.0
  %1537 = vmatprep.subr.mxu0 0.0
  %1538 = vmatpush1.msra.mxu0 0.0
  %1539 = vmatprep.subr.mxu0 0.0
  %1540 = vmatpush1.msra.mxu0 0.0
  %1541 = vmatprep.subr.mxu0 0.0
  %1542 = vmatpush1.msra.mxu0 0.0
  %1543 = vmatprep.subr.mxu0 0.0
  %1544 = vmatpush1.msra.mxu0 0.0
  %1545 = vmatprep.subr.mxu0 0.0
  %1546 = vmatpush1.msra.mxu0 0.0
  %1547 = vmatprep.subr.mxu0 0.0
  %1548 = vmatpush1.msra.mxu0 0.0
  %1549 = vmatprep.subr.mxu0 0.0
  %1550 = vmatpush1.msra.mxu0 0.0
  %1551 = vmatprep.subr.mxu0 0.0
  %1552 = vmatpush1.msra.mxu0 0.0
  %1553 = vmatprep.subr.mxu0 0.0
  %1554 = vmatpush1.msra.mxu0 0.0
  %1555 = vmatprep.mubr.f32.mxu0 0.0
  %1556 = vmatmul.mubr.f32.gmra.mrb[0].mxu0 %v1104
  %v1557 = vpop.f32.mrb[0].mxu0
  %v1558 = vadd.f32 0.0, %v1557
  %v1559 = vpop.f32.mrb[0].mxu0
  %1560 = vdwg.mxu0
  %v1561 = vld [vmem:[#allocation2 + $0x50] sm:$0xff]
  %v1562 = vmul.f32 %v1558, %v1561
  %v1563 = vadd.f32 %v1486, %v1562
  %v1564 = vld [vmem:[%s5 + $0x30] sm:$0xff]
  %v1565 = vld [vmem:[%s5 + $0x70] sm:$0xff]
  %v1566 = vld [vmem:[%s5 + $0xb0] sm:$0xff]
  %v1567 = vld [vmem:[%s5 + $0xf0] sm:$0xff]
  %1568 = vmatprep.subr.mxu0 0.0
  %1569 = vmatpush1.msra.mxu0 %v1564
  %1570 = vmatprep.subr.mxu0 0.0
  %1571 = vmatpush1.msra.mxu0 %v1565
  %1572 = vmatprep.subr.mxu0 0.0
  %1573 = vmatpush1.msra.mxu0 %v1566
  %1574 = vmatprep.subr.mxu0 0.0
  %1575 = vmatpush1.msra.mxu0 %v1567
  %1576 = vmatprep.subr.mxu0 0.0
  %1577 = vmatpush1.msra.mxu0 0.0
  %1578 = vmatprep.subr.mxu0 0.0
  %1579 = vmatpush1.msra.mxu0 0.0
  %1580 = vmatprep.subr.mxu0 0.0
  %1581 = vmatpush1.msra.mxu0 0.0
  %1582 = vmatprep.subr.mxu0 0.0
  %1583 = vmatpush1.msra.mxu0 0.0
  %1584 = vmatprep.subr.mxu0 0.0
  %1585 = vmatpush1.msra.mxu0 0.0
  %1586 = vmatprep.subr.mxu0 0.0
  %1587 = vmatpush1.msra.mxu0 0.0
  %1588 = vmatprep.subr.mxu0 0.0
  %1589 = vmatpush1.msra.mxu0 0.0
  %1590 = vmatprep.subr.mxu0 0.0
  %1591 = vmatpush1.msra.mxu0 0.0
  %1592 = vmatprep.subr.mxu0 0.0
  %1593 = vmatpush1.msra.mxu0 0.0
  %1594 = vmatprep.subr.mxu0 0.0
  %1595 = vmatpush1.msra.mxu0 0.0
  %1596 = vmatprep.subr.mxu0 0.0
  %1597 = vmatpush1.msra.mxu0 0.0
  %1598 = vmatprep.subr.mxu0 0.0
  %1599 = vmatpush1.msra.mxu0 0.0
  %1600 = vmatprep.subr.mxu0 0.0
  %1601 = vmatpush1.msra.mxu0 0.0
  %1602 = vmatprep.subr.mxu0 0.0
  %1603 = vmatpush1.msra.mxu0 0.0
  %1604 = vmatprep.subr.mxu0 0.0
  %1605 = vmatpush1.msra.mxu0 0.0
  %1606 = vmatprep.subr.mxu0 0.0
  %1607 = vmatpush1.msra.mxu0 0.0
  %1608 = vmatprep.subr.mxu0 0.0
  %1609 = vmatpush1.msra.mxu0 0.0
  %1610 = vmatprep.subr.mxu0 0.0
  %1611 = vmatpush1.msra.mxu0 0.0
  %1612 = vmatprep.subr.mxu0 0.0
  %1613 = vmatpush1.msra.mxu0 0.0
  %1614 = vmatprep.subr.mxu0 0.0
  %1615 = vmatpush1.msra.mxu0 0.0
  %1616 = vmatprep.subr.mxu0 0.0
  %1617 = vmatpush1.msra.mxu0 0.0
  %1618 = vmatprep.subr.mxu0 0.0
  %1619 = vmatpush1.msra.mxu0 0.0
  %1620 = vmatprep.subr.mxu0 0.0
  %1621 = vmatpush1.msra.mxu0 0.0
  %1622 = vmatprep.subr.mxu0 0.0
  %1623 = vmatpush1.msra.mxu0 0.0
  %1624 = vmatprep.subr.mxu0 0.0
  %1625 = vmatpush1.msra.mxu0 0.0
  %1626 = vmatprep.subr.mxu0 0.0
  %1627 = vmatpush1.msra.mxu0 0.0
  %1628 = vmatprep.subr.mxu0 0.0
  %1629 = vmatpush1.msra.mxu0 0.0
  %1630 = vmatprep.subr.mxu0 0.0
  %1631 = vmatpush1.msra.mxu0 0.0
  %1632 = vmatprep.mubr.f32.mxu0 0.0
  %1633 = vmatmul.mubr.f32.gmra.mrb[0].mxu0 %v1104
  %v1634 = vpop.f32.mrb[0].mxu0
  %v1635 = vadd.f32 0.0, %v1634
  %v1636 = vpop.f32.mrb[0].mxu0
  %1637 = vdwg.mxu0
  %v1638 = vld [vmem:[#allocation2 + $0x58] sm:$0xff]
  %v1639 = vmul.f32 %v1635, %v1638
  %v1640 = vadd.f32 %v1563, %v1639
  %v1641 = vld [vmem:[%s5 + $0x38] sm:$0xff]
  %v1642 = vld [vmem:[%s5 + $0x78] sm:$0xff]
  %v1643 = vld [vmem:[%s5 + $0xb8] sm:$0xff]
  %v1644 = vld [vmem:[%s5 + $0xf8] sm:$0xff]
  %1645 = vmatprep.subr.mxu0 0.0
  %1646 = vmatpush1.msra.mxu0 %v1641
  %1647 = vmatprep.subr.mxu0 0.0
  %1648 = vmatpush1.msra.mxu0 %v1642
  %1649 = vmatprep.subr.mxu0 0.0
  %1650 = vmatpush1.msra.mxu0 %v1643
  %1651 = vmatprep.subr.mxu0 0.0
  %1652 = vmatpush1.msra.mxu0 %v1644
  %1653 = vmatprep.subr.mxu0 0.0
  %1654 = vmatpush1.msra.mxu0 0.0
  %1655 = vmatprep.subr.mxu0 0.0
  %1656 = vmatpush1.msra.mxu0 0.0
  %1657 = vmatprep.subr.mxu0 0.0
  %1658 = vmatpush1.msra.mxu0 0.0
  %1659 = vmatprep.subr.mxu0 0.0
  %1660 = vmatpush1.msra.mxu0 0.0
  %1661 = vmatprep.subr.mxu0 0.0
  %1662 = vmatpush1.msra.mxu0 0.0
  %1663 = vmatprep.subr.mxu0 0.0
  %1664 = vmatpush1.msra.mxu0 0.0
  %1665 = vmatprep.subr.mxu0 0.0
  %1666 = vmatpush1.msra.mxu0 0.0
  %1667 = vmatprep.subr.mxu0 0.0
  %1668 = vmatpush1.msra.mxu0 0.0
  %1669 = vmatprep.subr.mxu0 0.0
  %1670 = vmatpush1.msra.mxu0 0.0
  %1671 = vmatprep.subr.mxu0 0.0
  %1672 = vmatpush1.msra.mxu0 0.0
  %1673 = vmatprep.subr.mxu0 0.0
  %1674 = vmatpush1.msra.mxu0 0.0
  %1675 = vmatprep.subr.mxu0 0.0
  %1676 = vmatpush1.msra.mxu0 0.0
  %1677 = vmatprep.subr.mxu0 0.0
  %1678 = vmatpush1.msra.mxu0 0.0
  %1679 = vmatprep.subr.mxu0 0.0
  %1680 = vmatpush1.msra.mxu0 0.0
  %1681 = vmatprep.subr.mxu0 0.0
  %1682 = vmatpush1.msra.mxu0 0.0
  %1683 = vmatprep.subr.mxu0 0.0
  %1684 = vmatpush1.msra.mxu0 0.0
  %1685 = vmatprep.subr.mxu0 0.0
  %1686 = vmatpush1.msra.mxu0 0.0
  %1687 = vmatprep.subr.mxu0 0.0
  %1688 = vmatpush1.msra.mxu0 0.0
  %1689 = vmatprep.subr.mxu0 0.0
  %1690 = vmatpush1.msra.mxu0 0.0
  %1691 = vmatprep.subr.mxu0 0.0
  %1692 = vmatpush1.msra.mxu0 0.0
  %1693 = vmatprep.subr.mxu0 0.0
  %1694 = vmatpush1.msra.mxu0 0.0
  %1695 = vmatprep.subr.mxu0 0.0
  %1696 = vmatpush1.msra.mxu0 0.0
  %1697 = vmatprep.subr.mxu0 0.0
  %1698 = vmatpush1.msra.mxu0 0.0
  %1699 = vmatprep.subr.mxu0 0.0
  %1700 = vmatpush1.msra.mxu0 0.0
  %1701 = vmatprep.subr.mxu0 0.0
  %1702 = vmatpush1.msra.mxu0 0.0
  %1703 = vmatprep.subr.mxu0 0.0
  %1704 = vmatpush1.msra.mxu0 0.0
  %1705 = vmatprep.subr.mxu0 0.0
  %1706 = vmatpush1.msra.mxu0 0.0
  %1707 = vmatprep.subr.mxu0 0.0
  %1708 = vmatpush1.msra.mxu0 0.0
  %1709 = vmatprep.mubr.f32.mxu0 0.0
  %1710 = vmatmul.mubr.f32.gmra.mrb[0].mxu0 %v1104
  %v1711 = vpop.f32.mrb[0].mxu0
  %v1712 = vadd.f32 0.0, %v1711
  %v1713 = vpop.f32.mrb[0].mxu0
  %1714 = vdwg.mxu0
  %v1715 = vld [vmem:[#allocation2 + $0x60] sm:$0xff]
  %v1716 = vmul.f32 %v1712, %v1715
  %v1717 = vadd.f32 %v1640, %v1716
  %v1718 = vld [vmem:[#allocation2 + $0x68] sm:$0xff]
  %v1719 = vadd.f32 %v1718, %v1717
  %1721 = vrot.lane.b32.xlu0 %v1717, 96
  %v1722 = vpop.permute.xlu0 %1721
  %v1724 = vadd.f32 %v1719, %v1722
  %1725 = vrot.lane.b32.xlu0 %v1717, 64
  %v1726 = vpop.permute.xlu0 %1725
  %v1728 = vadd.f32 %v1724, %v1726
  %1729 = vrot.lane.b32.xlu0 %v1717, 32
  %v1730 = vpop.permute.xlu0 %1729
  %v1732 = vadd.f32 %v1728, %v1730
  %v1733 = vmax.f32 %v1732, 0.0
  %v1734 = vld [vmem:[#allocation2 + $0x70] sm:$0xff]
  %v1735 = vld [vmem:[#allocation2 + $0x78] sm:$0xff]
  %v1736 = vmul.f32 %v1733, %v1734
  %v1737 = vsel %vm1102, %v1736, 0.0
  %1738 = vadd.xlane.f32.xlu0 %v1737
  %v1739 = vpop.xlane.xlu0 %1738
  %v1740 = vadd.f32 %v1739, %v1735
  %1742 = vset.pattern.permute.xlu0 0
  %1743 = vperm.xlu0 %1742, %v1740
  %v1744 = vpop.permute.xlu0 %1743
  %1746 = vst [vmem:[%s6] sm:$0xff] %v1744
  // Predicated region
  $region26: #{h_critic_forward.1} parent=0 // pred_check
    _
  $region27: #{h_critic_forward.1} parent=0 // pred_check_branch
    %1748 = sbr.rel (0) target = $region29
  $region28: #{h_critic_forward.1} parent=0 // pred_region
    _
  $region29: #{h_critic_forward.1} parent=0 // pred_fallthru
    _
  // Predicated region
  $region30: #{h_critic_forward.1} parent=0 // pred_check
    _
  $region31: #{h_critic_forward.1} parent=0 // pred_check_branch
    %1750 = sbr.rel (0) target = $region33
  $region32: #{h_critic_forward.1} parent=0 // pred_region
    _
  $region33: #{h_critic_forward.1} parent=0 // pred_fallthru
    _

</llo_original>
